<compile_context>
chip_gen: v7x
topology: tpu7x:2x2x1
jax: 0.10.0
libtpu: 0.0.40
codegen_flags: <defaults>
</compile_context>

<pallas_src>
import jax
import jax.numpy as jnp
from jax.experimental import pallas as pl
from jax.experimental.pallas import tpu as pltpu


def _make_kernel(inv_b, tb):
    """Build the two-pass kernel; inv_b = 1/B and tb are baked in as constants."""
    sub_ok = (tb % 8 == 0)

    def kernel(x_ref, w4_ref, g_ref, beta_ref, wh_ref, bh_ref,   # inputs
               out_ref,                                           # output
               h_ref, stats_ref, scale_ref):                      # scratch
        p = pl.program_id(0)          # 0: stats pass, 1: normalize+heads pass
        i = pl.program_id(1)          # batch-tile index
        row0 = pl.multiple_of(i * tb, tb)

        @pl.when(p == 0)
        def _stats_pass():
            @pl.when(i == 0)
            def _():
                stats_ref[...] = jnp.zeros_like(stats_ref)

            # layer4 matmul: bf16 x bf16 -> f32 accumulate on the MXU.
            # b4 bias is intentionally omitted: it cancels under training-mode BN.
            h = jnp.dot(x_ref[...], w4_ref[...],
                        preferred_element_type=jnp.float32)

            # Park the h tile (bf16) in the resident VMEM slab for pass 1.
            # Stats below use the f32 h (pre-cast) so BN statistics stay f32.
            h_ref[pl.ds(row0, tb), :] = h.astype(jnp.bfloat16)

            # Batch statistics on the VPU (slack under the HBM-bound matmul):
            # fold the tile into (8,128) sublane-group partial sums instead of
            # M=1 MXU matvecs; no per-tile cross-sublane XLU reduce either.
            h2 = h * h
            if sub_ok:
                stats_ref[0:8, :] += jnp.sum(h.reshape(tb // 8, 8, 128), axis=0)
                stats_ref[8:16, :] += jnp.sum(h2.reshape(tb // 8, 8, 128), axis=0)
            else:
                # Odd/tiny tile fallback: plain axis-0 reduce into row 0 of each half.
                stats_ref[0:1, :] += jnp.sum(h, axis=0, keepdims=True)
                stats_ref[8:9, :] += jnp.sum(h2, axis=0, keepdims=True)

        @pl.when(p == 1)
        def _head_pass():
            @pl.when(i == 0)
            def _():
                # Collapse the 8 sublane partials once, then fold BatchNorm
                # (training-mode, biased variance, eps=1e-5) into scale/shift
                # so per-tile work is a single FMA.
                s1 = jnp.sum(stats_ref[0:8, :], axis=0, keepdims=True)
                s2 = jnp.sum(stats_ref[8:16, :], axis=0, keepdims=True)
                mean = s1 * inv_b
                var = s2 * inv_b - mean * mean
                a = g_ref[...] * jax.lax.rsqrt(var + 1e-5)
                scale_ref[0:1, :] = a
                scale_ref[1:2, :] = beta_ref[...] - mean * a

            h = h_ref[pl.ds(row0, tb), :].astype(jnp.float32)
            y = h * scale_ref[0:1, :] + scale_ref[1:2, :]
            y = jnp.where(y > 0, y, 0.1 * y)          # LeakyReLU(0.1)
            # One fused, lane-dense bf16 head matmul (disc | mu | var | zero-pad),
            # f32 accumulation, full-lane unmasked vst on the (TB,128) output.
            out_ref[...] = (jnp.dot(y.astype(jnp.bfloat16), wh_ref[...],
                                    preferred_element_type=jnp.float32)
                            + bh_ref[...])

    return kernel


def _pick_batch_tile(b):
    # Prefer large tiles: amortizes the ~0.35us per-grid-step overhead (biggest
    # win on v7x, where a 512-row bf16 x tile DMA roughly equals the step cost).
    for tb in (2048, 1024, 512, 256, 128, 64, 32, 16):
        if b % tb == 0:
            return tb
    return b  # tiny/odd batch: single full-batch tile


def recogniser_forward(x, params, tb=None):
    b, k = x.shape
    assert k == 1024, "Recogniser expects 1024 input features"
    tb = tb if tb is not None else _pick_batch_tile(b)
    if b % tb != 0:
        raise ValueError(f"batch {b} must be divisible by batch tile {tb}")
    num_tiles = b // tb

    # bf16 streaming activations + weights for layer4 (f32 accumulation).
    x_bf16 = x.astype(jnp.bfloat16)
    w4 = params["w4"].astype(jnp.bfloat16)

    # Fused lane-dense head weights/bias: [wd | wm | wv | zeros] -> 128 lanes.
    # Weights stored bf16 (single-pass MXU path); bias stays f32.
    wh = jnp.zeros((128, 128), jnp.float32)
    wh = wh.at[:, 0:10].set(params["wd"])
    wh = wh.at[:, 10:12].set(params["wm"])
    wh = wh.at[:, 12:14].set(params["wv"])
    wh = wh.astype(jnp.bfloat16)
    bh = jnp.zeros((1, 128), jnp.float32)
    bh = bh.at[:, 0:10].set(params["bd"])
    bh = bh.at[:, 10:12].set(params["bm"])
    bh = bh.at[:, 12:14].set(params["bv"])

    const = lambda p, i: (0, 0)  # weights/biases: fetched once, stay resident
    # x is only needed in pass 0; during pass 1 the index map stays pinned on the
    # LAST pass-0 block, so the pass boundary triggers no redundant x DMA.
    x_map = lambda p, i: ((1 - p) * i + p * (num_tiles - 1), 0)

    grid_spec = pltpu.PrefetchScalarGridSpec(
        num_scalar_prefetch=0,
        grid=(2, num_tiles),  # (pass, batch tile); pass 0 fully precedes pass 1
        in_specs=[
            pl.BlockSpec((tb, 1024), x_map),    # x (bf16)
            pl.BlockSpec((1024, 128), const),   # w4 (bf16)
            pl.BlockSpec((1, 128), const),      # gamma
            pl.BlockSpec((1, 128), const),      # beta
            pl.BlockSpec((128, 128), const),    # fused head weights (bf16)
            pl.BlockSpec((1, 128), const),      # fused head bias (f32)
        ],
        # Output only written in pass 1; pass 0 parks on block 0 and the block
        # index is unchanged across the pass boundary, so no garbage writebacks
        # ever hit HBM. (Do not change the pass-0 out index_map.)
        out_specs=pl.BlockSpec((tb, 128), lambda p, i: (p * i, 0)),
        scratch_shapes=[
            pltpu.VMEM((b, 128), jnp.bfloat16),  # resident h slab (bf16, both passes)
            pltpu.VMEM((16, 128), jnp.float32),  # [8-row partial sum(h) | sum(h^2)]
            pltpu.VMEM((2, 128), jnp.float32),   # folded BN scale / shift
        ],
    )

    # Rough VMEM budget; raise the scoped limit only when needed, clamped to the
    # current generation's physical VMEM (v7x is 64 MiB, v5e/v6e 128 MiB).
    est_vmem = (b * 128 * 2                       # bf16 h slab
                + 2 * tb * 1024 * 2               # double-buffered bf16 x tiles
                + 2 * tb * 128 * 4                # double-buffered f32 out tiles
                + 2 * (1024 * 128 * 2 + 128 * 128 * 2 + 4 * 128 * 4)  # constants
                + (2 << 20))                      # headroom
    cp = dict(dimension_semantics=("arbitrary", "arbitrary"))
    if est_vmem > (30 << 20):
        try:
            phys = pltpu.get_tpu_info().vmem_capacity_bytes
        except Exception:  # pragma: no cover - conservative fallback
            phys = 64 << 20
        cp["vmem_limit_bytes"] = min(est_vmem + (4 << 20), phys - (4 << 20))

    out = pl.pallas_call(
        _make_kernel(1.0 / b, tb),
        out_shape=jax.ShapeDtypeStruct((b, 128), jnp.float32),
        grid_spec=grid_spec,
        compiler_params=pltpu.CompilerParams(**cp),
    )(x_bf16, w4, params["gamma"], params["beta"], wh, bh)

    return out[:, 0:10], out[:, 10:12], out[:, 12:14]


def init_params(key):
    """Deterministic synthetic init matching PyTorch Linear default scaling."""
    ks = jax.random.split(key, 4)

    def linear(k, fan_in, fan_out):
        kw, kb = jax.random.split(k)
        bound = 1.0 / jnp.sqrt(fan_in)
        w = jax.random.uniform(kw, (fan_in, fan_out), jnp.float32, -bound, bound)
        bb = jax.random.uniform(kb, (1, fan_out), jnp.float32, -bound, bound)
        return w, bb

    w4, b4 = linear(ks[0], 1024, 128)
    wd, bd = linear(ks[1], 128, 10)
    wm, bm = linear(ks[2], 128, 2)
    wv, bv = linear(ks[3], 128, 2)
    gamma = jnp.ones((1, 128), jnp.float32)   # BatchNorm1d weight init
    beta = jnp.zeros((1, 128), jnp.float32)   # BatchNorm1d bias init
    return {
        "w4": w4, "b4": b4, "gamma": gamma, "beta": beta,
        "wd": wd, "bd": bd, "wm": wm, "bm": bm, "wv": wv, "bv": bv,
    }


def reference_forward(x, p):
    """Pure-JAX mirror of the kernel's precision choices (bf16 matmul inputs,
    bf16 h slab, f32 accumulation/statistics).  b4 is omitted because it cancels
    exactly under training-mode BatchNorm (same as the kernel)."""
    h = jnp.dot(x.astype(jnp.bfloat16), p["w4"].astype(jnp.bfloat16),
                preferred_element_type=jnp.float32)
    mean = jnp.mean(h, axis=0, keepdims=True)
    var = jnp.mean(h * h, axis=0, keepdims=True) - mean * mean
    a = p["gamma"] * jax.lax.rsqrt(var + 1e-5)
    y = h.astype(jnp.bfloat16).astype(jnp.float32) * a + (p["beta"] - mean * a)
    y = jnp.where(y > 0, y, 0.1 * y)
    yb = y.astype(jnp.bfloat16)

    def head(w, bias):
        return jnp.dot(yb, w.astype(jnp.bfloat16),
                       preferred_element_type=jnp.float32) + bias

    return head(p["wd"], p["bd"]), head(p["wm"], p["bm"]), head(p["wv"], p["bv"])


def reference_forward_f32(x, p):
    """Full-precision reference matching the PyTorch module semantics exactly
    (f32 matmuls, b4 included, two-pass biased batch variance)."""
    h = x @ p["w4"] + p["b4"]
    mean = jnp.mean(h, axis=0, keepdims=True)
    var = jnp.mean((h - mean) ** 2, axis=0, keepdims=True)
    hn = (h - mean) * jax.lax.rsqrt(var + 1e-5) * p["gamma"] + p["beta"]
    hn = jnp.where(hn > 0, hn, 0.1 * hn)
    return (hn @ p["wd"] + p["bd"],
            hn @ p["wm"] + p["bm"],
            hn @ p["wv"] + p["bv"])


if __name__ == "__main__":
    key = jax.random.PRNGKey(0)
    k_param, k_x = jax.random.split(key)

    B = 256    # small, but enough to exercise multi-tile BN stat accumulation
    TB = 128   # force 2 batch tiles -> grid (2 passes, 2 tiles)
    params = init_params(k_param)
    x = jax.random.normal(k_x, (B, 1024), jnp.float32)

    disc_logits, mu, var = recogniser_forward(x, params, tb=TB)
    jax.block_until_ready((disc_logits, mu, var))

    assert disc_logits.shape == (B, 10) and mu.shape == (B, 2) and var.shape == (B, 2)

    # 1) Tight check against the precision-mirrored reference (validates the
    #    kernel's matmuls, BN folding, LeakyReLU and head packing).
    rd, rm, rv = reference_forward(x, params)
    assert jnp.allclose(disc_logits, rd, atol=5e-3, rtol=5e-3)
    assert jnp.allclose(mu, rm, atol=5e-3, rtol=5e-3)
    assert jnp.allclose(var, rv, atol=5e-3, rtol=5e-3)

    # 2) Looser check against the exact f32 PyTorch-semantics reference; the gap
    #    is the intentional bf16 storage of x / W4 / h-slab / head operands.
    fd, fm, fv = reference_forward_f32(x, params)
    assert jnp.allclose(disc_logits, fd, atol=3e-2, rtol=3e-2)
    assert jnp.allclose(mu, fm, atol=3e-2, rtol=3e-2)
    assert jnp.allclose(var, fv, atol=3e-2, rtol=3e-2)

    print("KERNEL_OK")
</pallas_src>

<mosaic_0001>
module attributes {stable_mosaic.version = 11 : i64} {
  func.func @kernel(%arg0: i32, %arg1: i32, %arg2: memref<128x1024xbf16, #tpu.memory_space<vmem>>, %arg3: memref<1024x128xbf16, #tpu.memory_space<vmem>>, %arg4: memref<1x128xf32, #tpu.memory_space<vmem>>, %arg5: memref<1x128xf32, #tpu.memory_space<vmem>>, %arg6: memref<128x128xbf16, #tpu.memory_space<vmem>>, %arg7: memref<1x128xf32, #tpu.memory_space<vmem>>, %arg8: memref<128x128xf32, #tpu.memory_space<vmem>>, %arg9: memref<256x128xbf16, #tpu.memory_space<vmem>>, %arg10: memref<16x128xf32, #tpu.memory_space<vmem>>, %arg11: memref<2x128xf32, #tpu.memory_space<vmem>>) attributes {dimension_semantics = [#tpu.dimension_semantics<arbitrary>, #tpu.dimension_semantics<arbitrary>], iteration_bounds = array<i64: 2, 2>, scalar_prefetch = 0 : i64, scratch_operands = 3 : i64, tpu.core_type = #tpu.core_type<tc>, window_params = [{transform_indices = @transform_0, window_bounds = array<i64: 128, 1024>}, {pipeline_mode = #tpu.pipeline_mode<synchronous>, transform_indices = @transform_1, window_bounds = array<i64: 1024, 128>}, {pipeline_mode = #tpu.pipeline_mode<synchronous>, transform_indices = @transform_2, window_bounds = array<i64: 1, 128>}, {pipeline_mode = #tpu.pipeline_mode<synchronous>, transform_indices = @transform_3, window_bounds = array<i64: 1, 128>}, {pipeline_mode = #tpu.pipeline_mode<synchronous>, transform_indices = @transform_4, window_bounds = array<i64: 128, 128>}, {pipeline_mode = #tpu.pipeline_mode<synchronous>, transform_indices = @transform_5, window_bounds = array<i64: 1, 128>}, {transform_indices = @transform_6, window_bounds = array<i64: 128, 128>}]} {
    %c128_i32 = arith.constant 128 : i32
    %0 = arith.muli %arg1, %c128_i32 : i32
    %1 = tpu.assume_multiple %0, 128 : i32
    %c0_i32 = arith.constant 0 : i32
    %2 = arith.cmpi eq, %arg0, %c0_i32 : i32
    %3 = arith.extui %2 : i1 to i32
    %c0_i32_0 = arith.constant 0 : i32
    %4 = arith.cmpi ne, %3, %c0_i32_0 : i32
    scf.if %4 {
      %c0_i32_2 = arith.constant 0 : i32
      %8 = arith.cmpi eq, %arg1, %c0_i32_2 : i32
      %9 = arith.extui %8 : i1 to i32
      %c0_i32_3 = arith.constant 0 : i32
      %10 = arith.cmpi ne, %9, %c0_i32_3 : i32
      scf.if %10 {
        %cst_17 = arith.constant 0.000000e+00 : f32
        %28 = vector.broadcast %cst_17 : f32 to vector<16x128xf32>
        %c0_18 = arith.constant 0 : index
        %c0_19 = arith.constant 0 : index
        %29 = vector.load %arg10[%c0_18, %c0_19] : memref<16x128xf32, #tpu.memory_space<vmem>>, vector<16x128xf32>
        tpu.vector_store %arg10[%c0_18, %c0_19], %28 {strides = array<i32>} : memref<16x128xf32, #tpu.memory_space<vmem>>, vector<16x128xf32>,
      } else {
      }
      %c0 = arith.constant 0 : index
      %c0_4 = arith.constant 0 : index
      %11 = vector.load %arg2[%c0, %c0_4] : memref<128x1024xbf16, #tpu.memory_space<vmem>>, vector<128x1024xbf16>
      %c0_5 = arith.constant 0 : index
      %c0_6 = arith.constant 0 : index
      %12 = vector.load %arg3[%c0_5, %c0_6] : memref<1024x128xbf16, #tpu.memory_space<vmem>>, vector<1024x128xbf16>
      %cst = arith.constant dense<0.000000e+00> : vector<128x128xf32>
      %13 = tpu.matmul %11, %12, %cst {dimension_numbers = #tpu.dot_dimension_numbers<[1], [0], [0], [1], [0, 0, 1, 1], [], []>} : vector<128x1024xbf16>, vector<1024x128xbf16>, vector<128x128xf32> -> vector<128x128xf32>
      %14 = arith.truncf %13 : vector<128x128xf32> to vector<128x128xbf16>
      %15 = arith.index_cast %1 : i32 to index
      %c0_7 = arith.constant 0 : index
      %16 = vector.load %arg9[%15, %c0_7] : memref<256x128xbf16, #tpu.memory_space<vmem>>, vector<128x128xbf16>
      tpu.vector_store %arg9[%15, %c0_7], %14 {strides = array<i32>} : memref<256x128xbf16, #tpu.memory_space<vmem>>, vector<128x128xbf16>,
      %17 = arith.mulf %13, %13 : vector<128x128xf32>
      %c0_8 = arith.constant 0 : index
      %c0_9 = arith.constant 0 : index
      %18 = vector.load %arg10[%c0_8, %c0_9] : memref<16x128xf32, #tpu.memory_space<vmem>>, vector<8x128xf32>
      %19 = vector.shape_cast %13 : vector<128x128xf32> to vector<16x8x128xf32>
      %cst_10 = arith.constant dense<0.000000e+00> : vector<8x128xf32>
      %20 = vector.multi_reduction <add>, %19, %cst_10 [0] : vector<16x8x128xf32> to vector<8x128xf32>
      %21 = arith.addf %18, %20 : vector<8x128xf32>
      %c0_11 = arith.constant 0 : index
      %c0_12 = arith.constant 0 : index
      %22 = vector.load %arg10[%c0_11, %c0_12] : memref<16x128xf32, #tpu.memory_space<vmem>>, vector<8x128xf32>
      tpu.vector_store %arg10[%c0_11, %c0_12], %21 {strides = array<i32>} : memref<16x128xf32, #tpu.memory_space<vmem>>, vector<8x128xf32>,
      %c8 = arith.constant 8 : index
      %c0_13 = arith.constant 0 : index
      %23 = vector.load %arg10[%c8, %c0_13] : memref<16x128xf32, #tpu.memory_space<vmem>>, vector<8x128xf32>
      %24 = vector.shape_cast %17 : vector<128x128xf32> to vector<16x8x128xf32>
      %cst_14 = arith.constant dense<0.000000e+00> : vector<8x128xf32>
      %25 = vector.multi_reduction <add>, %24, %cst_14 [0] : vector<16x8x128xf32> to vector<8x128xf32>
      %26 = arith.addf %23, %25 : vector<8x128xf32>
      %c8_15 = arith.constant 8 : index
      %c0_16 = arith.constant 0 : index
      %27 = vector.load %arg10[%c8_15, %c0_16] : memref<16x128xf32, #tpu.memory_space<vmem>>, vector<8x128xf32>
      tpu.vector_store %arg10[%c8_15, %c0_16], %26 {strides = array<i32>} : memref<16x128xf32, #tpu.memory_space<vmem>>, vector<8x128xf32>,
    } else {
    }
    %c1_i32 = arith.constant 1 : i32
    %5 = arith.cmpi eq, %arg0, %c1_i32 : i32
    %6 = arith.extui %5 : i1 to i32
    %c0_i32_1 = arith.constant 0 : i32
    %7 = arith.cmpi ne, %6, %c0_i32_1 : i32
    scf.if %7 {
      %c0_i32_2 = arith.constant 0 : i32
      %8 = arith.cmpi eq, %arg1, %c0_i32_2 : i32
      %9 = arith.extui %8 : i1 to i32
      %c0_i32_3 = arith.constant 0 : i32
      %10 = arith.cmpi ne, %9, %c0_i32_3 : i32
      scf.if %10 {
        %c0_15 = arith.constant 0 : index
        %c0_16 = arith.constant 0 : index
        %32 = vector.load %arg10[%c0_15, %c0_16] : memref<16x128xf32, #tpu.memory_space<vmem>>, vector<8x128xf32>
        %cst_17 = arith.constant dense<0.000000e+00> : vector<128xf32>
        %33 = vector.multi_reduction <add>, %32, %cst_17 [0] : vector<8x128xf32> to vector<128xf32>
        %34 = vector.shape_cast %33 : vector<128xf32> to vector<1x128xf32>
        %c8 = arith.constant 8 : index
        %c0_18 = arith.constant 0 : index
        %35 = vector.load %arg10[%c8, %c0_18] : memref<16x128xf32, #tpu.memory_space<vmem>>, vector<8x128xf32>
        %cst_19 = arith.constant dense<0.000000e+00> : vector<128xf32>
        %36 = vector.multi_reduction <add>, %35, %cst_19 [0] : vector<8x128xf32> to vector<128xf32>
        %37 = vector.shape_cast %36 : vector<128xf32> to vector<1x128xf32>
        %cst_20 = arith.constant 3.906250e-03 : f32
        %38 = vector.broadcast %cst_20 : f32 to vector<1x128xf32>
        %39 = arith.mulf %34, %38 : vector<1x128xf32>
        %cst_21 = arith.constant 3.906250e-03 : f32
        %40 = vector.broadcast %cst_21 : f32 to vector<1x128xf32>
        %41 = arith.mulf %37, %40 : vector<1x128xf32>
        %42 = arith.mulf %39, %39 : vector<1x128xf32>
        %43 = arith.subf %41, %42 : vector<1x128xf32>
        %c0_22 = arith.constant 0 : index
        %c0_23 = arith.constant 0 : index
        %44 = vector.load %arg4[%c0_22, %c0_23] : memref<1x128xf32, #tpu.memory_space<vmem>>, vector<1x128xf32>
        %cst_24 = arith.constant 9.99999974E-6 : f32
        %45 = vector.broadcast %cst_24 : f32 to vector<1x128xf32>
        %46 = arith.addf %43, %45 : vector<1x128xf32>
        %47 = math.rsqrt %46 : vector<1x128xf32>
        %48 = arith.mulf %44, %47 : vector<1x128xf32>
        %c0_25 = arith.constant 0 : index
        %c0_26 = arith.constant 0 : index
        %49 = vector.load %arg11[%c0_25, %c0_26] : memref<2x128xf32, #tpu.memory_space<vmem>>, vector<1x128xf32>
        tpu.vector_store %arg11[%c0_25, %c0_26], %48 {strides = array<i32>} : memref<2x128xf32, #tpu.memory_space<vmem>>, vector<1x128xf32>,
        %c0_27 = arith.constant 0 : index
        %c0_28 = arith.constant 0 : index
        %50 = vector.load %arg5[%c0_27, %c0_28] : memref<1x128xf32, #tpu.memory_space<vmem>>, vector<1x128xf32>
        %51 = arith.mulf %39, %48 : vector<1x128xf32>
        %52 = arith.subf %50, %51 : vector<1x128xf32>
        %c1_29 = arith.constant 1 : index
        %c0_30 = arith.constant 0 : index
        %53 = vector.load %arg11[%c1_29, %c0_30] : memref<2x128xf32, #tpu.memory_space<vmem>>, vector<1x128xf32>
        tpu.vector_store %arg11[%c1_29, %c0_30], %52 {strides = array<i32>} : memref<2x128xf32, #tpu.memory_space<vmem>>, vector<1x128xf32>,
      } else {
      }
      %11 = arith.index_cast %1 : i32 to index
      %c0 = arith.constant 0 : index
      %12 = vector.load %arg9[%11, %c0] : memref<256x128xbf16, #tpu.memory_space<vmem>>, vector<128x128xbf16>
      %13 = arith.extf %12 : vector<128x128xbf16> to vector<128x128xf32>
      %c0_4 = arith.constant 0 : index
      %c0_5 = arith.constant 0 : index
      %14 = vector.load %arg11[%c0_4, %c0_5] : memref<2x128xf32, #tpu.memory_space<vmem>>, vector<1x128xf32>
      %15 = vector.broadcast %14 : vector<1x128xf32> to vector<128x128xf32>
      %16 = arith.mulf %13, %15 : vector<128x128xf32>
      %c1 = arith.constant 1 : index
      %c0_6 = arith.constant 0 : index
      %17 = vector.load %arg11[%c1, %c0_6] : memref<2x128xf32, #tpu.memory_space<vmem>>, vector<1x128xf32>
      %18 = vector.broadcast %17 : vector<1x128xf32> to vector<128x128xf32>
      %19 = arith.addf %16, %18 : vector<128x128xf32>
      %cst = arith.constant 0.000000e+00 : f32
      %20 = vector.broadcast %cst : f32 to vector<128x128xf32>
      %21 = arith.cmpf ogt, %19, %20 : vector<128x128xf32>
      %cst_7 = arith.constant 1.000000e-01 : f32
      %22 = vector.broadcast %cst_7 : f32 to vector<128x128xf32>
      %23 = arith.mulf %22, %19 : vector<128x128xf32>
      %24 = arith.select %21, %19, %23 : vector<128x128xi1>, vector<128x128xf32>
      %25 = arith.truncf %24 : vector<128x128xf32> to vector<128x128xbf16>
      %c0_8 = arith.constant 0 : index
      %c0_9 = arith.constant 0 : index
      %26 = vector.load %arg6[%c0_8, %c0_9] : memref<128x128xbf16, #tpu.memory_space<vmem>>, vector<128x128xbf16>
      %cst_10 = arith.constant dense<0.000000e+00> : vector<128x128xf32>
      %27 = tpu.matmul %25, %26, %cst_10 {dimension_numbers = #tpu.dot_dimension_numbers<[1], [0], [0], [1], [0, 0, 1, 1], [], []>} : vector<128x128xbf16>, vector<128x128xbf16>, vector<128x128xf32> -> vector<128x128xf32>
      %c0_11 = arith.constant 0 : index
      %c0_12 = arith.constant 0 : index
      %28 = vector.load %arg7[%c0_11, %c0_12] : memref<1x128xf32, #tpu.memory_space<vmem>>, vector<1x128xf32>
      %29 = vector.broadcast %28 : vector<1x128xf32> to vector<128x128xf32>
      %30 = arith.addf %27, %29 : vector<128x128xf32>
      %c0_13 = arith.constant 0 : index
      %c0_14 = arith.constant 0 : index
      %31 = vector.load %arg8[%c0_13, %c0_14] : memref<128x128xf32, #tpu.memory_space<vmem>>, vector<128x128xf32>
      tpu.vector_store %arg8[%c0_13, %c0_14], %30 {strides = array<i32>} : memref<128x128xf32, #tpu.memory_space<vmem>>, vector<128x128xf32>,
    } else {
    }
    return
  }
  func.func @transform_0(%arg0: i32, %arg1: i32) -> (i32, i32) {
    %c1_i32 = arith.constant 1 : i32
    %0 = arith.subi %c1_i32, %arg0 : i32
    %1 = arith.muli %0, %arg1 : i32
    %c1_i32_0 = arith.constant 1 : i32
    %2 = arith.muli %arg0, %c1_i32_0 : i32
    %3 = arith.addi %1, %2 : i32
    %c0_i32 = arith.constant 0 : i32
    %c0_i32_1 = arith.constant 0 : i32
    return %3, %c0_i32 : i32, i32
  }
  func.func @transform_1(%arg0: i32, %arg1: i32) -> (i32, i32) {
    %c0_i32 = arith.constant 0 : i32
    %c0_i32_0 = arith.constant 0 : i32
    %c0_i32_1 = arith.constant 0 : i32
    return %c0_i32, %c0_i32_0 : i32, i32
  }
  func.func @transform_2(%arg0: i32, %arg1: i32) -> (i32, i32) {
    %c0_i32 = arith.constant 0 : i32
    %c0_i32_0 = arith.constant 0 : i32
    %c0_i32_1 = arith.constant 0 : i32
    return %c0_i32, %c0_i32_0 : i32, i32
  }
  func.func @transform_3(%arg0: i32, %arg1: i32) -> (i32, i32) {
    %c0_i32 = arith.constant 0 : i32
    %c0_i32_0 = arith.constant 0 : i32
    %c0_i32_1 = arith.constant 0 : i32
    return %c0_i32, %c0_i32_0 : i32, i32
  }
  func.func @transform_4(%arg0: i32, %arg1: i32) -> (i32, i32) {
    %c0_i32 = arith.constant 0 : i32
    %c0_i32_0 = arith.constant 0 : i32
    %c0_i32_1 = arith.constant 0 : i32
    return %c0_i32, %c0_i32_0 : i32, i32
  }
  func.func @transform_5(%arg0: i32, %arg1: i32) -> (i32, i32) {
    %c0_i32 = arith.constant 0 : i32
    %c0_i32_0 = arith.constant 0 : i32
    %c0_i32_1 = arith.constant 0 : i32
    return %c0_i32, %c0_i32_0 : i32, i32
  }
  func.func @transform_6(%arg0: i32, %arg1: i32) -> (i32, i32) {
    %0 = arith.muli %arg0, %arg1 : i32
    %c0_i32 = arith.constant 0 : i32
    %c0_i32_0 = arith.constant 0 : i32
    return %0, %c0_i32 : i32, i32
  }
}

</mosaic_0001>

<llo_original>
// kernel: tpu_custom_call.1
$region0: #{tpu_custom_call.1}
  #allocation0 [shape = 'u32[]', space=smem, size = 0x4, offset = 0x4, fixed_abs, tag = 'smem constant byte address 0x4 - core index']
  #allocation1 [shape = 'u32[144,128]{1,0:T(1,128)}', space=vmem, size = 0x12000, scoped, tag = 'internal scratch']
  #allocation2 [shape = 'bf16[256,128]{1,0:T(16,128)(2,1)}', space=vmem, size = 0x10000, scoped, tag = 'scratch operand']
  #allocation3 [shape = 'f32[16,128]{1,0:T(8,128)}', space=vmem, size = 0x2000, scoped, tag = 'scratch operand']
  #allocation4 [shape = 'f32[2,128]{1,0:T(2,128)}', space=vmem, size = 0x400, scoped, tag = 'scratch operand']
  %s0 = inlined_call_operand.hbm [shape: bf16[256,1024], index: 0, kind: input, shape index: {}]
  %s1 = inlined_call_operand.hbm [shape: bf16[1024,128], index: 1, kind: input, shape index: {}]
  %s2 = inlined_call_operand.vmem [shape: f32[1,128], index: 2, kind: input, shape index: {}]
  %s3 = inlined_call_operand.vmem [shape: f32[1,128], index: 3, kind: input, shape index: {}]
  %s4 = inlined_call_operand.hbm [shape: bf16[128,128], index: 4, kind: input, shape index: {}]
  %s5 = inlined_call_operand.vmem [shape: f32[1,128], index: 5, kind: input, shape index: {}]
  %s6 = inlined_call_operand.hbm [shape: f32[256,128], index: 6, kind: output, shape index: {}]
  %s7 = sld [smem:[#allocation0]]
  $region85: #{tpu_custom_call.1} parent=0
    _
  %s9 = ssub.s32 1, %s7
  %s10 = scalar_select 0, %s9, %s7
  $region1: #{tpu_custom_call.1} parent=0
    #allocation5 [shape = 'u8[524288]{0}', space=vmem, size = 0x80000, scoped, tag = 'input window, operand 0']
    #allocation6 [shape = 's32[2]{0}', space=sflag, size = 0x8, scoped, tag = 'scoped memory for tpu_custom_call.1']
    #allocation7 [shape = 's32[2]{0}', space=sflag, size = 0x8, scoped, tag = 'scoped memory for tpu_custom_call.1']
    #allocation8 [shape = 'u8[262144]{0}', space=vmem, size = 0x40000, scoped, tag = 'input window, operand 1, single buffered']
    #allocation9 [shape = 's32[1]{0}', space=sflag, size = 0x4, scoped, tag = 'scoped memory for tpu_custom_call.1']
    #allocation10 [shape = 'u8[32768]{0}', space=vmem, size = 0x8000, scoped, tag = 'input window, operand 4, single buffered']
    #allocation11 [shape = 'u8[131072]{0}', space=vmem, size = 0x20000, scoped, tag = 'output window, operand 0']
    %11 = vsyncpa [#allocation6], 0
    %s12 = scalar_lea.sflag [#allocation6], 1
    %13 = vsyncpa %s12, 0
    %14 = vsyncpa [#allocation9], 0
    %15 = vsyncpa [#allocation7], 0
    %s16 = scalar_lea.sflag [#allocation7], 1
    %17 = vsyncpa %s16, 0
    loop: start=0, step=1, limit=6
    $region2: #{tpu_custom_call.1} parent=1 // loop_pre_header
      _
    $region3: #{tpu_custom_call.1} parent=1 // loop_header
      %s19 = sphi 0, %s23
      %p20 = scmp.ge.s32.totalorder %s19, 6
      %s26 = sphi 0, %s38
      %s27 = sphi 0, %s34
      %s28 = sphi 0, %s26
      %s29 = sphi 0, %s27
      %s30 = sphi 0, %s28
      %s31 = sphi 0, %s29
      %s47 = sphi 0, %s49
      %s50 = sphi 0, %s47
      %s51 = sphi 0, %s50
      %s67 = sphi 0, %s51
      %s71 = sphi 0, %s71
      %s73 = sphi 0, %s71
      %s74 = sphi 0, %s73
      %s88 = sphi 0, %s74
      %s92 = sphi 0, %s92
      %s94 = sphi 0, %s92
      %s95 = sphi 0, %s94
      %s109 = sphi 0, %s95
      %s113 = sphi 0, %s113
      %s115 = sphi 0, %s113
      %s116 = sphi 0, %s115
      %s130 = sphi 0, %s116
      %s134 = sphi 0, %s134
      %s136 = sphi 0, %s134
      %s137 = sphi 0, %s136
      %s151 = sphi 0, %s137
      %s155 = sphi 0, %s155
      %s157 = sphi 0, %s155
      %s158 = sphi 0, %s157
      %s172 = sphi 0, %s158
      %s180 = sphi 0, %s182
      %s183 = sphi 0, %s180
      %s184 = sphi 0, %s183
      %s200 = sphi 0, %s184
    $region4: #{tpu_custom_call.1} parent=1 // loop_header_branch
      %22 = sbr.rel (%p20) target = $region8
    $region5: #{tpu_custom_call.1} parent=1 // loop_body
      %s24 = ssub.s32 %s19, 1
      %s25 = ssub.s32 %s19, 2
      %s32 = sadd.s32 1, %s27
      %p33 = scmp.ge.s32.totalorder %s32, 2
      %s34 = scalar_select %p33, 0, %s32
      %s35 = sadd.s32 1, %s26
      %s36 = scalar_select %p33, %s35, %s26
      %p37 = scmp.ge.s32.totalorder %s36, 2
      %s38 = scalar_select %p37, 0, %s36
      %s39 = ssub.s32 1, %s26
      %s40 = smul.u32 %s39, %s27
      %s41 = sadd.s32 %s40, %s26
      %s42 = ssub.s32 1, %s38
      %s43 = smul.u32 %s42, %s34
      %s44 = sadd.s32 %s43, %s38
      %s45 = ssub.s32 %s41, %s44
      %p46 = scmp.eq.s32.totalorder %s45, 0
      %s48 = sadd.s32 %s47, 1
      %s49 = scalar_select %p46, %s47, %s48
      %p52 = pneg %p46
      %p53 = scmp.eq.s32.totalorder %s19, 3
      %p54 = por %p52, %p53
      %p55 = scmp.ne.s32.totalorder %s47, %s50
      %p56 = scmp.eq.s32.totalorder %s19, 0
      %p57 = por %p55, %p56
      %p58 = scmp.ne.s32.totalorder %s47, %s50
      %p59 = scmp.eq.s32.totalorder %s24, 3
      %p60 = por %p58, %p59
      %p61 = scmp.ne.s32.totalorder %s50, %s51
      %p62 = scmp.eq.s32.totalorder %s24, 0
      %p63 = por %p61, %p62
      %p64 = scmp.ne.s32.totalorder %s50, %s51
      %p65 = scmp.eq.s32.totalorder %s25, 3
      %p66 = por %p64, %p65
      %p68 = scmp.ne.s32.totalorder %s51, %s67
      %p69 = scmp.eq.s32.totalorder %s25, 0
      %p70 = por %p68, %p69
      %s72 = sadd.s32 %s71, 1
      %p75 = scmp.eq.s32.totalorder %s19, 3
      %p76 = scmp.ne.s32.totalorder %s71, %s73
      %p77 = scmp.eq.s32.totalorder %s19, 0
      %p78 = por %p76, %p77
      %p79 = scmp.ne.s32.totalorder %s71, %s73
      %p80 = scmp.eq.s32.totalorder %s24, 3
      %p81 = por %p79, %p80
      %p82 = scmp.ne.s32.totalorder %s73, %s74
      %p83 = scmp.eq.s32.totalorder %s24, 0
      %p84 = por %p82, %p83
      %p85 = scmp.ne.s32.totalorder %s73, %s74
      %p86 = scmp.eq.s32.totalorder %s25, 3
      %p87 = por %p85, %p86
      %p89 = scmp.ne.s32.totalorder %s74, %s88
      %p90 = scmp.eq.s32.totalorder %s25, 0
      %p91 = por %p89, %p90
      %s93 = sadd.s32 %s92, 1
      %p96 = scmp.eq.s32.totalorder %s19, 3
      %p97 = scmp.ne.s32.totalorder %s92, %s94
      %p98 = scmp.eq.s32.totalorder %s19, 0
      %p99 = por %p97, %p98
      %p100 = scmp.ne.s32.totalorder %s92, %s94
      %p101 = scmp.eq.s32.totalorder %s24, 3
      %p102 = por %p100, %p101
      %p103 = scmp.ne.s32.totalorder %s94, %s95
      %p104 = scmp.eq.s32.totalorder %s24, 0
      %p105 = por %p103, %p104
      %p106 = scmp.ne.s32.totalorder %s94, %s95
      %p107 = scmp.eq.s32.totalorder %s25, 3
      %p108 = por %p106, %p107
      %p110 = scmp.ne.s32.totalorder %s95, %s109
      %p111 = scmp.eq.s32.totalorder %s25, 0
      %p112 = por %p110, %p111
      %s114 = sadd.s32 %s113, 1
      %p117 = scmp.eq.s32.totalorder %s19, 3
      %p118 = scmp.ne.s32.totalorder %s113, %s115
      %p119 = scmp.eq.s32.totalorder %s19, 0
      %p120 = por %p118, %p119
      %p121 = scmp.ne.s32.totalorder %s113, %s115
      %p122 = scmp.eq.s32.totalorder %s24, 3
      %p123 = por %p121, %p122
      %p124 = scmp.ne.s32.totalorder %s115, %s116
      %p125 = scmp.eq.s32.totalorder %s24, 0
      %p126 = por %p124, %p125
      %p127 = scmp.ne.s32.totalorder %s115, %s116
      %p128 = scmp.eq.s32.totalorder %s25, 3
      %p129 = por %p127, %p128
      %p131 = scmp.ne.s32.totalorder %s116, %s130
      %p132 = scmp.eq.s32.totalorder %s25, 0
      %p133 = por %p131, %p132
      %s135 = sadd.s32 %s134, 1
      %p138 = scmp.eq.s32.totalorder %s19, 3
      %p139 = scmp.ne.s32.totalorder %s134, %s136
      %p140 = scmp.eq.s32.totalorder %s19, 0
      %p141 = por %p139, %p140
      %p142 = scmp.ne.s32.totalorder %s134, %s136
      %p143 = scmp.eq.s32.totalorder %s24, 3
      %p144 = por %p142, %p143
      %p145 = scmp.ne.s32.totalorder %s136, %s137
      %p146 = scmp.eq.s32.totalorder %s24, 0
      %p147 = por %p145, %p146
      %p148 = scmp.ne.s32.totalorder %s136, %s137
      %p149 = scmp.eq.s32.totalorder %s25, 3
      %p150 = por %p148, %p149
      %p152 = scmp.ne.s32.totalorder %s137, %s151
      %p153 = scmp.eq.s32.totalorder %s25, 0
      %p154 = por %p152, %p153
      %s156 = sadd.s32 %s155, 1
      %p159 = scmp.eq.s32.totalorder %s19, 3
      %p160 = scmp.ne.s32.totalorder %s155, %s157
      %p161 = scmp.eq.s32.totalorder %s19, 0
      %p162 = por %p160, %p161
      %p163 = scmp.ne.s32.totalorder %s155, %s157
      %p164 = scmp.eq.s32.totalorder %s24, 3
      %p165 = por %p163, %p164
      %p166 = scmp.ne.s32.totalorder %s157, %s158
      %p167 = scmp.eq.s32.totalorder %s24, 0
      %p168 = por %p166, %p167
      %p169 = scmp.ne.s32.totalorder %s157, %s158
      %p170 = scmp.eq.s32.totalorder %s25, 3
      %p171 = por %p169, %p170
      %p173 = scmp.ne.s32.totalorder %s158, %s172
      %p174 = scmp.eq.s32.totalorder %s25, 0
      %p175 = por %p173, %p174
      %s176 = smul.u32 %s26, %s27
      %s177 = smul.u32 %s38, %s34
      %s178 = ssub.s32 %s176, %s177
      %p179 = scmp.eq.s32.totalorder %s178, 0
      %s181 = sadd.s32 %s180, 1
      %s182 = scalar_select %p179, %s180, %s181
      %p185 = pneg %p179
      %p186 = scmp.eq.s32.totalorder %s19, 3
      %p187 = por %p185, %p186
      %p188 = scmp.ne.s32.totalorder %s180, %s183
      %p189 = scmp.eq.s32.totalorder %s19, 0
      %p190 = por %p188, %p189
      %p191 = scmp.ne.s32.totalorder %s180, %s183
      %p192 = scmp.eq.s32.totalorder %s24, 3
      %p193 = por %p191, %p192
      %p194 = scmp.ne.s32.totalorder %s183, %s184
      %p195 = scmp.eq.s32.totalorder %s24, 0
      %p196 = por %p194, %p195
      %p197 = scmp.ne.s32.totalorder %s183, %s184
      %p198 = scmp.eq.s32.totalorder %s25, 3
      %p199 = por %p197, %p198
      %p201 = scmp.ne.s32.totalorder %s184, %s200
      %p202 = scmp.eq.s32.totalorder %s25, 0
      %p203 = por %p201, %p202
      %p204 = scmp.le.s32.totalorder 1, %s19
      %p205 = scmp.lt.s32.totalorder %s19, 5
      %p206 = pnand %p204, %p205
      %p207 = pneg %p206
      // Predicated region
      $region9: #{tpu_custom_call.1} parent=5 // pred_check
        _
      $region10: #{tpu_custom_call.1} parent=5 // pred_check_branch
        %209 = sbr.rel (%p206) target = $region12
      $region11: #{tpu_custom_call.1} parent=5 // pred_region
        %s210 = ssub.s32 %s19, 1
        // Predicated region
        $region13: #{tpu_custom_call.1} parent=11 // pred_check
          %p211 = pneg %p84
        $region14: #{tpu_custom_call.1} parent=11 // pred_check_branch
          %213 = sbr.rel (%p211) target = $region16
        $region15: #{tpu_custom_call.1} parent=11 // pred_region
          %s215 = ssub.s32 8192, 8192
          %216 = vsyncadd [#allocation9], %s215
          %s217 = sshll.u32 [#allocation8], 4
          %s218 = int_to_ptr.vmem [resolvable:$true] %s217
          %223 = dma.hbm_to_vmem [thread:$0]  %s1, 8192, %s218, [#allocation9], 64, 64, 4
        $region16: #{tpu_custom_call.1} parent=11 // pred_fallthru
          _
        // Predicated region
        $region17: #{tpu_custom_call.1} parent=11 // pred_check
          %p224 = pneg %p105
        $region18: #{tpu_custom_call.1} parent=11 // pred_check_branch
          %226 = sbr.rel (%p224) target = $region20
        $region19: #{tpu_custom_call.1} parent=11 // pred_region
          _
        $region20: #{tpu_custom_call.1} parent=11 // pred_fallthru
          _
        // Predicated region
        $region21: #{tpu_custom_call.1} parent=11 // pred_check
          %p227 = pneg %p126
        $region22: #{tpu_custom_call.1} parent=11 // pred_check_branch
          %229 = sbr.rel (%p227) target = $region24
        $region23: #{tpu_custom_call.1} parent=11 // pred_region
          _
        $region24: #{tpu_custom_call.1} parent=11 // pred_fallthru
          _
        // Predicated region
        $region25: #{tpu_custom_call.1} parent=11 // pred_check
          %p230 = pneg %p147
        $region26: #{tpu_custom_call.1} parent=11 // pred_check_branch
          %232 = sbr.rel (%p230) target = $region28
        $region27: #{tpu_custom_call.1} parent=11 // pred_region
          %s234 = ssub.s32 1024, 1024
          %235 = vsyncadd [#allocation9], %s234
          %s236 = sshll.u32 [#allocation10], 4
          %s237 = int_to_ptr.vmem [resolvable:$true] %s236
          %242 = dma.hbm_to_vmem [thread:$0]  %s4, 1024, %s237, [#allocation9], 64, 64, 4
        $region28: #{tpu_custom_call.1} parent=11 // pred_fallthru
          _
        // Predicated region
        $region29: #{tpu_custom_call.1} parent=11 // pred_check
          %p243 = pneg %p168
        $region30: #{tpu_custom_call.1} parent=11 // pred_check_branch
          %245 = sbr.rel (%p243) target = $region32
        $region31: #{tpu_custom_call.1} parent=11 // pred_region
          _
        $region32: #{tpu_custom_call.1} parent=11 // pred_fallthru
          _
      $region12: #{tpu_custom_call.1} parent=5 // pred_fallthru
        _
      %p246 = scmp.lt.s32.totalorder %s19, 4
      // Predicated region
      $region33: #{tpu_custom_call.1} parent=5 // pred_check
        %p247 = pneg %p246
      $region34: #{tpu_custom_call.1} parent=5 // pred_check_branch
        %249 = sbr.rel (%p247) target = $region36
      $region35: #{tpu_custom_call.1} parent=5 // pred_region
        // Predicated region
        $region37: #{tpu_custom_call.1} parent=35 // pred_check
          %p250 = pneg %p57
        $region38: #{tpu_custom_call.1} parent=35 // pred_check_branch
          %252 = sbr.rel (%p250) target = $region40
        $region39: #{tpu_custom_call.1} parent=35 // pred_region
          %s253 = sand.u32 %s47, 1
          %s254 = scalar_lea.sflag [#allocation6], %s253
          %s255 = sand.u32 %s47, 1
          %s256 = smul.addr %s255, 512
          %s257 = scalar_lea.vmem [#allocation5], %s256
          %s258 = ssub.s32 1, %s26
          %s259 = smul.u32 %s258, %s27
          %s260 = sadd.s32 %s259, %s26
          %s261 = smul.u32 16, %s260
          %s263 = ssub.s32 8192, 8192
          %264 = vsyncadd %s254, %s263
          %s265 = smul.addr %s261, 8
          %s266 = smul.addr %s265, 64
          %s267 = scalar_lea.hbm %s0, %s266
          %s268 = sshll.u32 %s257, 4
          %s269 = int_to_ptr.vmem [resolvable:$true] %s268
          %274 = dma.hbm_to_vmem [thread:$0]  %s267, 8192, %s269, %s254, 512, 512, 32
        $region40: #{tpu_custom_call.1} parent=35 // pred_fallthru
          _
      $region36: #{tpu_custom_call.1} parent=5 // pred_fallthru
        _
      %p275 = scmp.le.s32.totalorder 1, %s19
      %p276 = scmp.lt.s32.totalorder %s19, 5
      %p277 = pnand %p275, %p276
      %p278 = pneg %p277
      // Predicated region
      $region41: #{tpu_custom_call.1} parent=5 // pred_check
        _
      $region42: #{tpu_custom_call.1} parent=5 // pred_check_branch
        %280 = sbr.rel (%p277) target = $region44
      $region43: #{tpu_custom_call.1} parent=5 // pred_region
        %s281 = ssub.s32 %s19, 1
        %s282 = sand.u32 %s50, 1
        %s283 = scalar_lea.sflag [#allocation6], %s282
        %s284 = sand.u32 %s50, 1
        %s285 = smul.addr %s284, 512
        %s286 = scalar_lea.vmem [#allocation5], %s285
        // Predicated region
        $region45: #{tpu_custom_call.1} parent=43 // pred_check
          %p287 = pneg %p63
        $region46: #{tpu_custom_call.1} parent=43 // pred_check_branch
          %289 = sbr.rel (%p287) target = $region48
        $region47: #{tpu_custom_call.1} parent=43 // pred_region
          %290 = dma.done %s283, 8192
        $region48: #{tpu_custom_call.1} parent=43 // pred_fallthru
          _
        // Predicated region
        $region49: #{tpu_custom_call.1} parent=43 // pred_check
          %p291 = pneg %p84
        $region50: #{tpu_custom_call.1} parent=43 // pred_check_branch
          %293 = sbr.rel (%p291) target = $region52
        $region51: #{tpu_custom_call.1} parent=43 // pred_region
          %294 = dma.done [#allocation9], 8192
        $region52: #{tpu_custom_call.1} parent=43 // pred_fallthru
          _
        // Predicated region
        $region53: #{tpu_custom_call.1} parent=43 // pred_check
          %p295 = pneg %p147
        $region54: #{tpu_custom_call.1} parent=43 // pred_check_branch
          %297 = sbr.rel (%p295) target = $region56
        $region55: #{tpu_custom_call.1} parent=43 // pred_region
          %298 = dma.done [#allocation9], 1024
        $region56: #{tpu_custom_call.1} parent=43 // pred_fallthru
          _
        %s299 = sand.u32 %s50, 1
        %s300 = scalar_lea.sflag [#allocation6], %s299
        %s301 = sand.u32 %s50, 1
        %s302 = smul.addr %s301, 512
        %s303 = scalar_lea.vmem [#allocation5], %s302
        %p304 = pneg %p63
        %p305 = pneg %p60
        %p306 = pneg %p84
        %p307 = pneg %p81
        %p308 = pneg %p105
        %p309 = pneg %p102
        %p310 = pneg %p126
        %p311 = pneg %p123
        %p312 = pneg %p147
        %p313 = pneg %p144
        %p314 = pneg %p168
        %p315 = pneg %p165
        %p316 = pneg %p196
        %p317 = pneg %p193
        %s318 = sand.u32 %s183, 1
        %s319 = scalar_lea.sflag [#allocation7], %s318
        %s320 = sand.u32 %s183, 1
        %s321 = smul.addr %s320, 128
        %s322 = scalar_lea.vmem [#allocation11], %s321
        %s323 = ssub.s32 1, %s28
        %s324 = smul.u32 %s323, %s29
        %s325 = sadd.s32 %s324, %s28
        %s326 = smul.u32 16, %s325
        %s327 = smul.u32 %s28, %s29
        %s328 = smul.u32 16, %s327
        %s330 = smul.u32 %s29, 128
        %p331 = scmp.eq.s32.totalorder %s28, 0
        // Predicated region
        $region57: #{tpu_custom_call.1} parent=43 // pred_check
          %p332 = pneg %p331
        $region58: #{tpu_custom_call.1} parent=43 // pred_check_branch
          %334 = sbr.rel (%p332) target = $region60
        $region59: #{tpu_custom_call.1} parent=43 // pred_region
          %p335 = scmp.eq.s32.totalorder %s29, 0
          // Predicated region
          $region61: #{tpu_custom_call.1} parent=59 // pred_check
            %p336 = pneg %p335
          $region62: #{tpu_custom_call.1} parent=59 // pred_check_branch
            %338 = sbr.rel (%p336) target = $region64
          $region63: #{tpu_custom_call.1} parent=59 // pred_region
            %339 = vst [vmem:[#allocation3] sm:$0xff] 0.0
            %340 = vst [vmem:[#allocation3 + $0x8] sm:$0xff] 0.0
          $region64: #{tpu_custom_call.1} parent=59 // pred_fallthru
            _
          %v341 = vld [vmem:[%s286] sm:$0xff]
          %v342 = vld [vmem:[%s286 + $0x8] sm:$0xff]
          %v343 = vld [vmem:[%s286 + $0x10] sm:$0xff]
          %v344 = vld [vmem:[%s286 + $0x18] sm:$0xff]
          %v345 = vld [vmem:[%s286 + $0x20] sm:$0xff]
          %v346 = vld [vmem:[%s286 + $0x28] sm:$0xff]
          %v347 = vld [vmem:[%s286 + $0x30] sm:$0xff]
          %v348 = vld [vmem:[%s286 + $0x38] sm:$0xff]
          %v349 = vld [vmem:[%s286 + $0x40] sm:$0xff]
          %v350 = vld [vmem:[%s286 + $0x48] sm:$0xff]
          %v351 = vld [vmem:[%s286 + $0x50] sm:$0xff]
          %v352 = vld [vmem:[%s286 + $0x58] sm:$0xff]
          %v353 = vld [vmem:[%s286 + $0x60] sm:$0xff]
          %v354 = vld [vmem:[%s286 + $0x68] sm:$0xff]
          %v355 = vld [vmem:[%s286 + $0x70] sm:$0xff]
          %v356 = vld [vmem:[%s286 + $0x78] sm:$0xff]
          %v357 = vld [vmem:[%s286 + $0x80] sm:$0xff]
          %v358 = vld [vmem:[%s286 + $0x88] sm:$0xff]
          %v359 = vld [vmem:[%s286 + $0x90] sm:$0xff]
          %v360 = vld [vmem:[%s286 + $0x98] sm:$0xff]
          %v361 = vld [vmem:[%s286 + $0xa0] sm:$0xff]
          %v362 = vld [vmem:[%s286 + $0xa8] sm:$0xff]
          %v363 = vld [vmem:[%s286 + $0xb0] sm:$0xff]
          %v364 = vld [vmem:[%s286 + $0xb8] sm:$0xff]
          %v365 = vld [vmem:[%s286 + $0xc0] sm:$0xff]
          %v366 = vld [vmem:[%s286 + $0xc8] sm:$0xff]
          %v367 = vld [vmem:[%s286 + $0xd0] sm:$0xff]
          %v368 = vld [vmem:[%s286 + $0xd8] sm:$0xff]
          %v369 = vld [vmem:[%s286 + $0xe0] sm:$0xff]
          %v370 = vld [vmem:[%s286 + $0xe8] sm:$0xff]
          %v371 = vld [vmem:[%s286 + $0xf0] sm:$0xff]
          %v372 = vld [vmem:[%s286 + $0xf8] sm:$0xff]
          %v373 = vld [vmem:[%s286 + $0x100] sm:$0xff]
          %v374 = vld [vmem:[%s286 + $0x108] sm:$0xff]
          %v375 = vld [vmem:[%s286 + $0x110] sm:$0xff]
          %v376 = vld [vmem:[%s286 + $0x118] sm:$0xff]
          %v377 = vld [vmem:[%s286 + $0x120] sm:$0xff]
          %v378 = vld [vmem:[%s286 + $0x128] sm:$0xff]
          %v379 = vld [vmem:[%s286 + $0x130] sm:$0xff]
          %v380 = vld [vmem:[%s286 + $0x138] sm:$0xff]
          %v381 = vld [vmem:[%s286 + $0x140] sm:$0xff]
          %v382 = vld [vmem:[%s286 + $0x148] sm:$0xff]
          %v383 = vld [vmem:[%s286 + $0x150] sm:$0xff]
          %v384 = vld [vmem:[%s286 + $0x158] sm:$0xff]
          %v385 = vld [vmem:[%s286 + $0x160] sm:$0xff]
          %v386 = vld [vmem:[%s286 + $0x168] sm:$0xff]
          %v387 = vld [vmem:[%s286 + $0x170] sm:$0xff]
          %v388 = vld [vmem:[%s286 + $0x178] sm:$0xff]
          %v389 = vld [vmem:[%s286 + $0x180] sm:$0xff]
          %v390 = vld [vmem:[%s286 + $0x188] sm:$0xff]
          %v391 = vld [vmem:[%s286 + $0x190] sm:$0xff]
          %v392 = vld [vmem:[%s286 + $0x198] sm:$0xff]
          %v393 = vld [vmem:[%s286 + $0x1a0] sm:$0xff]
          %v394 = vld [vmem:[%s286 + $0x1a8] sm:$0xff]
          %v395 = vld [vmem:[%s286 + $0x1b0] sm:$0xff]
          %v396 = vld [vmem:[%s286 + $0x1b8] sm:$0xff]
          %v397 = vld [vmem:[%s286 + $0x1c0] sm:$0xff]
          %v398 = vld [vmem:[%s286 + $0x1c8] sm:$0xff]
          %v399 = vld [vmem:[%s286 + $0x1d0] sm:$0xff]
          %v400 = vld [vmem:[%s286 + $0x1d8] sm:$0xff]
          %v401 = vld [vmem:[%s286 + $0x1e0] sm:$0xff]
          %v402 = vld [vmem:[%s286 + $0x1e8] sm:$0xff]
          %v403 = vld [vmem:[%s286 + $0x1f0] sm:$0xff]
          %v404 = vld [vmem:[%s286 + $0x1f8] sm:$0xff]
          %v405 = vld [vmem:[#allocation8] sm:$0xf]
          %v406 = vld [vmem:[#allocation8 + $0x4] sm:$0xf]
          %v407 = vld [vmem:[#allocation8 + $0x8] sm:$0xf]
          %v408 = vld [vmem:[#allocation8 + $0xc] sm:$0xf]
          %v409 = vld [vmem:[#allocation8 + $0x10] sm:$0xf]
          %v410 = vld [vmem:[#allocation8 + $0x14] sm:$0xf]
          %v411 = vld [vmem:[#allocation8 + $0x18] sm:$0xf]
          %v412 = vld [vmem:[#allocation8 + $0x1c] sm:$0xf]
          %v413 = vld [vmem:[#allocation8 + $0x20] sm:$0xf]
          %v414 = vld [vmem:[#allocation8 + $0x24] sm:$0xf]
          %v415 = vld [vmem:[#allocation8 + $0x28] sm:$0xf]
          %v416 = vld [vmem:[#allocation8 + $0x2c] sm:$0xf]
          %v417 = vld [vmem:[#allocation8 + $0x30] sm:$0xf]
          %v418 = vld [vmem:[#allocation8 + $0x34] sm:$0xf]
          %v419 = vld [vmem:[#allocation8 + $0x38] sm:$0xf]
          %v420 = vld [vmem:[#allocation8 + $0x3c] sm:$0xf]
          %v421 = vld [vmem:[#allocation8 + $0x40] sm:$0xf]
          %v422 = vld [vmem:[#allocation8 + $0x44] sm:$0xf]
          %v423 = vld [vmem:[#allocation8 + $0x48] sm:$0xf]
          %v424 = vld [vmem:[#allocation8 + $0x4c] sm:$0xf]
          %v425 = vld [vmem:[#allocation8 + $0x50] sm:$0xf]
          %v426 = vld [vmem:[#allocation8 + $0x54] sm:$0xf]
          %v427 = vld [vmem:[#allocation8 + $0x58] sm:$0xf]
          %v428 = vld [vmem:[#allocation8 + $0x5c] sm:$0xf]
          %v429 = vld [vmem:[#allocation8 + $0x60] sm:$0xf]
          %v430 = vld [vmem:[#allocation8 + $0x64] sm:$0xf]
          %v431 = vld [vmem:[#allocation8 + $0x68] sm:$0xf]
          %v432 = vld [vmem:[#allocation8 + $0x6c] sm:$0xf]
          %v433 = vld [vmem:[#allocation8 + $0x70] sm:$0xf]
          %v434 = vld [vmem:[#allocation8 + $0x74] sm:$0xf]
          %v435 = vld [vmem:[#allocation8 + $0x78] sm:$0xf]
          %v436 = vld [vmem:[#allocation8 + $0x7c] sm:$0xf]
          %v437 = vld [vmem:[#allocation8 + $0x80] sm:$0xf]
          %v438 = vld [vmem:[#allocation8 + $0x84] sm:$0xf]
          %v439 = vld [vmem:[#allocation8 + $0x88] sm:$0xf]
          %v440 = vld [vmem:[#allocation8 + $0x8c] sm:$0xf]
          %v441 = vld [vmem:[#allocation8 + $0x90] sm:$0xf]
          %v442 = vld [vmem:[#allocation8 + $0x94] sm:$0xf]
          %v443 = vld [vmem:[#allocation8 + $0x98] sm:$0xf]
          %v444 = vld [vmem:[#allocation8 + $0x9c] sm:$0xf]
          %v445 = vld [vmem:[#allocation8 + $0xa0] sm:$0xf]
          %v446 = vld [vmem:[#allocation8 + $0xa4] sm:$0xf]
          %v447 = vld [vmem:[#allocation8 + $0xa8] sm:$0xf]
          %v448 = vld [vmem:[#allocation8 + $0xac] sm:$0xf]
          %v449 = vld [vmem:[#allocation8 + $0xb0] sm:$0xf]
          %v450 = vld [vmem:[#allocation8 + $0xb4] sm:$0xf]
          %v451 = vld [vmem:[#allocation8 + $0xb8] sm:$0xf]
          %v452 = vld [vmem:[#allocation8 + $0xbc] sm:$0xf]
          %v453 = vld [vmem:[#allocation8 + $0xc0] sm:$0xf]
          %v454 = vld [vmem:[#allocation8 + $0xc4] sm:$0xf]
          %v455 = vld [vmem:[#allocation8 + $0xc8] sm:$0xf]
          %v456 = vld [vmem:[#allocation8 + $0xcc] sm:$0xf]
          %v457 = vld [vmem:[#allocation8 + $0xd0] sm:$0xf]
          %v458 = vld [vmem:[#allocation8 + $0xd4] sm:$0xf]
          %v459 = vld [vmem:[#allocation8 + $0xd8] sm:$0xf]
          %v460 = vld [vmem:[#allocation8 + $0xdc] sm:$0xf]
          %v461 = vld [vmem:[#allocation8 + $0xe0] sm:$0xf]
          %v462 = vld [vmem:[#allocation8 + $0xe4] sm:$0xf]
          %v463 = vld [vmem:[#allocation8 + $0xe8] sm:$0xf]
          %v464 = vld [vmem:[#allocation8 + $0xec] sm:$0xf]
          %v465 = vld [vmem:[#allocation8 + $0xf0] sm:$0xf]
          %v466 = vld [vmem:[#allocation8 + $0xf4] sm:$0xf]
          %v467 = vld [vmem:[#allocation8 + $0xf8] sm:$0xf]
          %v468 = vld [vmem:[#allocation8 + $0xfc] sm:$0xf]
          %v469 = vld [vmem:[#allocation8 + $0x100] sm:$0xf]
          %v470 = vld [vmem:[#allocation8 + $0x104] sm:$0xf]
          %v471 = vld [vmem:[#allocation8 + $0x108] sm:$0xf]
          %v472 = vld [vmem:[#allocation8 + $0x10c] sm:$0xf]
          %v473 = vld [vmem:[#allocation8 + $0x110] sm:$0xf]
          %v474 = vld [vmem:[#allocation8 + $0x114] sm:$0xf]
          %v475 = vld [vmem:[#allocation8 + $0x118] sm:$0xf]
          %v476 = vld [vmem:[#allocation8 + $0x11c] sm:$0xf]
          %v477 = vld [vmem:[#allocation8 + $0x120] sm:$0xf]
          %v478 = vld [vmem:[#allocation8 + $0x124] sm:$0xf]
          %v479 = vld [vmem:[#allocation8 + $0x128] sm:$0xf]
          %v480 = vld [vmem:[#allocation8 + $0x12c] sm:$0xf]
          %v481 = vld [vmem:[#allocation8 + $0x130] sm:$0xf]
          %v482 = vld [vmem:[#allocation8 + $0x134] sm:$0xf]
          %v483 = vld [vmem:[#allocation8 + $0x138] sm:$0xf]
          %v484 = vld [vmem:[#allocation8 + $0x13c] sm:$0xf]
          %v485 = vld [vmem:[#allocation8 + $0x140] sm:$0xf]
          %v486 = vld [vmem:[#allocation8 + $0x144] sm:$0xf]
          %v487 = vld [vmem:[#allocation8 + $0x148] sm:$0xf]
          %v488 = vld [vmem:[#allocation8 + $0x14c] sm:$0xf]
          %v489 = vld [vmem:[#allocation8 + $0x150] sm:$0xf]
          %v490 = vld [vmem:[#allocation8 + $0x154] sm:$0xf]
          %v491 = vld [vmem:[#allocation8 + $0x158] sm:$0xf]
          %v492 = vld [vmem:[#allocation8 + $0x15c] sm:$0xf]
          %v493 = vld [vmem:[#allocation8 + $0x160] sm:$0xf]
          %v494 = vld [vmem:[#allocation8 + $0x164] sm:$0xf]
          %v495 = vld [vmem:[#allocation8 + $0x168] sm:$0xf]
          %v496 = vld [vmem:[#allocation8 + $0x16c] sm:$0xf]
          %v497 = vld [vmem:[#allocation8 + $0x170] sm:$0xf]
          %v498 = vld [vmem:[#allocation8 + $0x174] sm:$0xf]
          %v499 = vld [vmem:[#allocation8 + $0x178] sm:$0xf]
          %v500 = vld [vmem:[#allocation8 + $0x17c] sm:$0xf]
          %v501 = vld [vmem:[#allocation8 + $0x180] sm:$0xf]
          %v502 = vld [vmem:[#allocation8 + $0x184] sm:$0xf]
          %v503 = vld [vmem:[#allocation8 + $0x188] sm:$0xf]
          %v504 = vld [vmem:[#allocation8 + $0x18c] sm:$0xf]
          %v505 = vld [vmem:[#allocation8 + $0x190] sm:$0xf]
          %v506 = vld [vmem:[#allocation8 + $0x194] sm:$0xf]
          %v507 = vld [vmem:[#allocation8 + $0x198] sm:$0xf]
          %v508 = vld [vmem:[#allocation8 + $0x19c] sm:$0xf]
          %v509 = vld [vmem:[#allocation8 + $0x1a0] sm:$0xf]
          %v510 = vld [vmem:[#allocation8 + $0x1a4] sm:$0xf]
          %v511 = vld [vmem:[#allocation8 + $0x1a8] sm:$0xf]
          %v512 = vld [vmem:[#allocation8 + $0x1ac] sm:$0xf]
          %v513 = vld [vmem:[#allocation8 + $0x1b0] sm:$0xf]
          %v514 = vld [vmem:[#allocation8 + $0x1b4] sm:$0xf]
          %v515 = vld [vmem:[#allocation8 + $0x1b8] sm:$0xf]
          %v516 = vld [vmem:[#allocation8 + $0x1bc] sm:$0xf]
          %v517 = vld [vmem:[#allocation8 + $0x1c0] sm:$0xf]
          %v518 = vld [vmem:[#allocation8 + $0x1c4] sm:$0xf]
          %v519 = vld [vmem:[#allocation8 + $0x1c8] sm:$0xf]
          %v520 = vld [vmem:[#allocation8 + $0x1cc] sm:$0xf]
          %v521 = vld [vmem:[#allocation8 + $0x1d0] sm:$0xf]
          %v522 = vld [vmem:[#allocation8 + $0x1d4] sm:$0xf]
          %v523 = vld [vmem:[#allocation8 + $0x1d8] sm:$0xf]
          %v524 = vld [vmem:[#allocation8 + $0x1dc] sm:$0xf]
          %v525 = vld [vmem:[#allocation8 + $0x1e0] sm:$0xf]
          %v526 = vld [vmem:[#allocation8 + $0x1e4] sm:$0xf]
          %v527 = vld [vmem:[#allocation8 + $0x1e8] sm:$0xf]
          %v528 = vld [vmem:[#allocation8 + $0x1ec] sm:$0xf]
          %v529 = vld [vmem:[#allocation8 + $0x1f0] sm:$0xf]
          %v530 = vld [vmem:[#allocation8 + $0x1f4] sm:$0xf]
          %v531 = vld [vmem:[#allocation8 + $0x1f8] sm:$0xf]
          %v532 = vld [vmem:[#allocation8 + $0x1fc] sm:$0xf]
          %v597 = vunpack.c.l.b16 %v341
          %v598 = vunpack.c.h.b16 %v341
          %v599 = vunpack.c.l.b16 %v342
          %v600 = vunpack.c.h.b16 %v342
          %v601 = vunpack.c.l.b16 %v343
          %v602 = vunpack.c.h.b16 %v343
          %v603 = vunpack.c.l.b16 %v344
          %v604 = vunpack.c.h.b16 %v344
          %v605 = vunpack.c.l.b16 %v345
          %v606 = vunpack.c.h.b16 %v345
          %v607 = vunpack.c.l.b16 %v346
          %v608 = vunpack.c.h.b16 %v346
          %v609 = vunpack.c.l.b16 %v347
          %v610 = vunpack.c.h.b16 %v347
          %v611 = vunpack.c.l.b16 %v348
          %v612 = vunpack.c.h.b16 %v348
          %v613 = vunpack.c.l.b16 %v349
          %v614 = vunpack.c.h.b16 %v349
          %v615 = vunpack.c.l.b16 %v350
          %v616 = vunpack.c.h.b16 %v350
          %v617 = vunpack.c.l.b16 %v351
          %v618 = vunpack.c.h.b16 %v351
          %v619 = vunpack.c.l.b16 %v352
          %v620 = vunpack.c.h.b16 %v352
          %v621 = vunpack.c.l.b16 %v353
          %v622 = vunpack.c.h.b16 %v353
          %v623 = vunpack.c.l.b16 %v354
          %v624 = vunpack.c.h.b16 %v354
          %v625 = vunpack.c.l.b16 %v355
          %v626 = vunpack.c.h.b16 %v355
          %v627 = vunpack.c.l.b16 %v356
          %v628 = vunpack.c.h.b16 %v356
          %v629 = vunpack.c.l.b16 %v357
          %v630 = vunpack.c.h.b16 %v357
          %v631 = vunpack.c.l.b16 %v358
          %v632 = vunpack.c.h.b16 %v358
          %v633 = vunpack.c.l.b16 %v359
          %v634 = vunpack.c.h.b16 %v359
          %v635 = vunpack.c.l.b16 %v360
          %v636 = vunpack.c.h.b16 %v360
          %v637 = vunpack.c.l.b16 %v361
          %v638 = vunpack.c.h.b16 %v361
          %v639 = vunpack.c.l.b16 %v362
          %v640 = vunpack.c.h.b16 %v362
          %v641 = vunpack.c.l.b16 %v363
          %v642 = vunpack.c.h.b16 %v363
          %v643 = vunpack.c.l.b16 %v364
          %v644 = vunpack.c.h.b16 %v364
          %v645 = vunpack.c.l.b16 %v365
          %v646 = vunpack.c.h.b16 %v365
          %v647 = vunpack.c.l.b16 %v366
          %v648 = vunpack.c.h.b16 %v366
          %v649 = vunpack.c.l.b16 %v367
          %v650 = vunpack.c.h.b16 %v367
          %v651 = vunpack.c.l.b16 %v368
          %v652 = vunpack.c.h.b16 %v368
          %v653 = vunpack.c.l.b16 %v369
          %v654 = vunpack.c.h.b16 %v369
          %v655 = vunpack.c.l.b16 %v370
          %v656 = vunpack.c.h.b16 %v370
          %v657 = vunpack.c.l.b16 %v371
          %v658 = vunpack.c.h.b16 %v371
          %v659 = vunpack.c.l.b16 %v372
          %v660 = vunpack.c.h.b16 %v372
          %v661 = vunpack.c.l.b16 %v373
          %v662 = vunpack.c.h.b16 %v373
          %v663 = vunpack.c.l.b16 %v374
          %v664 = vunpack.c.h.b16 %v374
          %v665 = vunpack.c.l.b16 %v375
          %v666 = vunpack.c.h.b16 %v375
          %v667 = vunpack.c.l.b16 %v376
          %v668 = vunpack.c.h.b16 %v376
          %v669 = vunpack.c.l.b16 %v377
          %v670 = vunpack.c.h.b16 %v377
          %v671 = vunpack.c.l.b16 %v378
          %v672 = vunpack.c.h.b16 %v378
          %v673 = vunpack.c.l.b16 %v379
          %v674 = vunpack.c.h.b16 %v379
          %v675 = vunpack.c.l.b16 %v380
          %v676 = vunpack.c.h.b16 %v380
          %v677 = vunpack.c.l.b16 %v381
          %v678 = vunpack.c.h.b16 %v381
          %v679 = vunpack.c.l.b16 %v382
          %v680 = vunpack.c.h.b16 %v382
          %v681 = vunpack.c.l.b16 %v383
          %v682 = vunpack.c.h.b16 %v383
          %v683 = vunpack.c.l.b16 %v384
          %v684 = vunpack.c.h.b16 %v384
          %v685 = vunpack.c.l.b16 %v385
          %v686 = vunpack.c.h.b16 %v385
          %v687 = vunpack.c.l.b16 %v386
          %v688 = vunpack.c.h.b16 %v386
          %v689 = vunpack.c.l.b16 %v387
          %v690 = vunpack.c.h.b16 %v387
          %v691 = vunpack.c.l.b16 %v388
          %v692 = vunpack.c.h.b16 %v388
          %v693 = vunpack.c.l.b16 %v389
          %v694 = vunpack.c.h.b16 %v389
          %v695 = vunpack.c.l.b16 %v390
          %v696 = vunpack.c.h.b16 %v390
          %v697 = vunpack.c.l.b16 %v391
          %v698 = vunpack.c.h.b16 %v391
          %v699 = vunpack.c.l.b16 %v392
          %v700 = vunpack.c.h.b16 %v392
          %v701 = vunpack.c.l.b16 %v393
          %v702 = vunpack.c.h.b16 %v393
          %v703 = vunpack.c.l.b16 %v394
          %v704 = vunpack.c.h.b16 %v394
          %v705 = vunpack.c.l.b16 %v395
          %v706 = vunpack.c.h.b16 %v395
          %v707 = vunpack.c.l.b16 %v396
          %v708 = vunpack.c.h.b16 %v396
          %v709 = vunpack.c.l.b16 %v397
          %v710 = vunpack.c.h.b16 %v397
          %v711 = vunpack.c.l.b16 %v398
          %v712 = vunpack.c.h.b16 %v398
          %v713 = vunpack.c.l.b16 %v399
          %v714 = vunpack.c.h.b16 %v399
          %v715 = vunpack.c.l.b16 %v400
          %v716 = vunpack.c.h.b16 %v400
          %v717 = vunpack.c.l.b16 %v401
          %v718 = vunpack.c.h.b16 %v401
          %v719 = vunpack.c.l.b16 %v402
          %v720 = vunpack.c.h.b16 %v402
          %v721 = vunpack.c.l.b16 %v403
          %v722 = vunpack.c.h.b16 %v403
          %v723 = vunpack.c.l.b16 %v404
          %v724 = vunpack.c.h.b16 %v404
          %v725 = vpack.c.b16 %v605, %v597
          %v726 = vpack.c.b16 %v606, %v598
          %v727 = vpack.c.b16 %v607, %v599
          %v728 = vpack.c.b16 %v608, %v600
          %v729 = vpack.c.b16 %v609, %v601
          %v730 = vpack.c.b16 %v610, %v602
          %v731 = vpack.c.b16 %v611, %v603
          %v732 = vpack.c.b16 %v612, %v604
          %v733 = vpack.c.b16 %v621, %v613
          %v734 = vpack.c.b16 %v622, %v614
          %v735 = vpack.c.b16 %v623, %v615
          %v736 = vpack.c.b16 %v624, %v616
          %v737 = vpack.c.b16 %v625, %v617
          %v738 = vpack.c.b16 %v626, %v618
          %v739 = vpack.c.b16 %v627, %v619
          %v740 = vpack.c.b16 %v628, %v620
          %v741 = vpack.c.b16 %v637, %v629
          %v742 = vpack.c.b16 %v638, %v630
          %v743 = vpack.c.b16 %v639, %v631
          %v744 = vpack.c.b16 %v640, %v632
          %v745 = vpack.c.b16 %v641, %v633
          %v746 = vpack.c.b16 %v642, %v634
          %v747 = vpack.c.b16 %v643, %v635
          %v748 = vpack.c.b16 %v644, %v636
          %v749 = vpack.c.b16 %v653, %v645
          %v750 = vpack.c.b16 %v654, %v646
          %v751 = vpack.c.b16 %v655, %v647
          %v752 = vpack.c.b16 %v656, %v648
          %v753 = vpack.c.b16 %v657, %v649
          %v754 = vpack.c.b16 %v658, %v650
          %v755 = vpack.c.b16 %v659, %v651
          %v756 = vpack.c.b16 %v660, %v652
          %v757 = vpack.c.b16 %v669, %v661
          %v758 = vpack.c.b16 %v670, %v662
          %v759 = vpack.c.b16 %v671, %v663
          %v760 = vpack.c.b16 %v672, %v664
          %v761 = vpack.c.b16 %v673, %v665
          %v762 = vpack.c.b16 %v674, %v666
          %v763 = vpack.c.b16 %v675, %v667
          %v764 = vpack.c.b16 %v676, %v668
          %v765 = vpack.c.b16 %v685, %v677
          %v766 = vpack.c.b16 %v686, %v678
          %v767 = vpack.c.b16 %v687, %v679
          %v768 = vpack.c.b16 %v688, %v680
          %v769 = vpack.c.b16 %v689, %v681
          %v770 = vpack.c.b16 %v690, %v682
          %v771 = vpack.c.b16 %v691, %v683
          %v772 = vpack.c.b16 %v692, %v684
          %v773 = vpack.c.b16 %v701, %v693
          %v774 = vpack.c.b16 %v702, %v694
          %v775 = vpack.c.b16 %v703, %v695
          %v776 = vpack.c.b16 %v704, %v696
          %v777 = vpack.c.b16 %v705, %v697
          %v778 = vpack.c.b16 %v706, %v698
          %v779 = vpack.c.b16 %v707, %v699
          %v780 = vpack.c.b16 %v708, %v700
          %v781 = vpack.c.b16 %v717, %v709
          %v782 = vpack.c.b16 %v718, %v710
          %v783 = vpack.c.b16 %v719, %v711
          %v784 = vpack.c.b16 %v720, %v712
          %v785 = vpack.c.b16 %v721, %v713
          %v786 = vpack.c.b16 %v722, %v714
          %v787 = vpack.c.b16 %v723, %v715
          %v788 = vpack.c.b16 %v724, %v716
          %v981 = vunpack.c.l.b16 %v405
          %v982 = vunpack.c.l.b16 %v406
          %v983 = vunpack.c.l.b16 %v407
          %v984 = vunpack.c.l.b16 %v408
          %v985 = vunpack.c.l.b16 %v409
          %v986 = vunpack.c.l.b16 %v410
          %v987 = vunpack.c.l.b16 %v411
          %v988 = vunpack.c.l.b16 %v412
          %v989 = vunpack.c.l.b16 %v413
          %v990 = vunpack.c.l.b16 %v414
          %v991 = vunpack.c.l.b16 %v415
          %v992 = vunpack.c.l.b16 %v416
          %v993 = vunpack.c.l.b16 %v417
          %v994 = vunpack.c.l.b16 %v418
          %v995 = vunpack.c.l.b16 %v419
          %v996 = vunpack.c.l.b16 %v420
          %v997 = vunpack.c.l.b16 %v421
          %v998 = vunpack.c.l.b16 %v422
          %v999 = vunpack.c.l.b16 %v423
          %v1000 = vunpack.c.l.b16 %v424
          %v1001 = vunpack.c.l.b16 %v425
          %v1002 = vunpack.c.l.b16 %v426
          %v1003 = vunpack.c.l.b16 %v427
          %v1004 = vunpack.c.l.b16 %v428
          %v1005 = vunpack.c.l.b16 %v429
          %v1006 = vunpack.c.l.b16 %v430
          %v1007 = vunpack.c.l.b16 %v431
          %v1008 = vunpack.c.l.b16 %v432
          %v1009 = vunpack.c.l.b16 %v433
          %v1010 = vunpack.c.l.b16 %v434
          %v1011 = vunpack.c.l.b16 %v435
          %v1012 = vunpack.c.l.b16 %v436
          %v1013 = vunpack.c.l.b16 %v437
          %v1014 = vunpack.c.l.b16 %v438
          %v1015 = vunpack.c.l.b16 %v439
          %v1016 = vunpack.c.l.b16 %v440
          %v1017 = vunpack.c.l.b16 %v441
          %v1018 = vunpack.c.l.b16 %v442
          %v1019 = vunpack.c.l.b16 %v443
          %v1020 = vunpack.c.l.b16 %v444
          %v1021 = vunpack.c.l.b16 %v445
          %v1022 = vunpack.c.l.b16 %v446
          %v1023 = vunpack.c.l.b16 %v447
          %v1024 = vunpack.c.l.b16 %v448
          %v1025 = vunpack.c.l.b16 %v449
          %v1026 = vunpack.c.l.b16 %v450
          %v1027 = vunpack.c.l.b16 %v451
          %v1028 = vunpack.c.l.b16 %v452
          %v1029 = vunpack.c.l.b16 %v453
          %v1030 = vunpack.c.l.b16 %v454
          %v1031 = vunpack.c.l.b16 %v455
          %v1032 = vunpack.c.l.b16 %v456
          %v1033 = vunpack.c.l.b16 %v457
          %v1034 = vunpack.c.l.b16 %v458
          %v1035 = vunpack.c.l.b16 %v459
          %v1036 = vunpack.c.l.b16 %v460
          %v1037 = vunpack.c.l.b16 %v461
          %v1038 = vunpack.c.l.b16 %v462
          %v1039 = vunpack.c.l.b16 %v463
          %v1040 = vunpack.c.l.b16 %v464
          %v1041 = vunpack.c.l.b16 %v465
          %v1042 = vunpack.c.l.b16 %v466
          %v1043 = vunpack.c.l.b16 %v467
          %v1044 = vunpack.c.l.b16 %v468
          %v1045 = vunpack.c.l.b16 %v469
          %v1046 = vunpack.c.l.b16 %v470
          %v1047 = vunpack.c.l.b16 %v471
          %v1048 = vunpack.c.l.b16 %v472
          %v1049 = vunpack.c.l.b16 %v473
          %v1050 = vunpack.c.l.b16 %v474
          %v1051 = vunpack.c.l.b16 %v475
          %v1052 = vunpack.c.l.b16 %v476
          %v1053 = vunpack.c.l.b16 %v477
          %v1054 = vunpack.c.l.b16 %v478
          %v1055 = vunpack.c.l.b16 %v479
          %v1056 = vunpack.c.l.b16 %v480
          %v1057 = vunpack.c.l.b16 %v481
          %v1058 = vunpack.c.l.b16 %v482
          %v1059 = vunpack.c.l.b16 %v483
          %v1060 = vunpack.c.l.b16 %v484
          %v1061 = vunpack.c.l.b16 %v485
          %v1062 = vunpack.c.l.b16 %v486
          %v1063 = vunpack.c.l.b16 %v487
          %v1064 = vunpack.c.l.b16 %v488
          %v1065 = vunpack.c.l.b16 %v489
          %v1066 = vunpack.c.l.b16 %v490
          %v1067 = vunpack.c.l.b16 %v491
          %v1068 = vunpack.c.l.b16 %v492
          %v1069 = vunpack.c.l.b16 %v493
          %v1070 = vunpack.c.l.b16 %v494
          %v1071 = vunpack.c.l.b16 %v495
          %v1072 = vunpack.c.l.b16 %v496
          %v1073 = vunpack.c.l.b16 %v497
          %v1074 = vunpack.c.l.b16 %v498
          %v1075 = vunpack.c.l.b16 %v499
          %v1076 = vunpack.c.l.b16 %v500
          %v1077 = vunpack.c.l.b16 %v501
          %v1078 = vunpack.c.l.b16 %v502
          %v1079 = vunpack.c.l.b16 %v503
          %v1080 = vunpack.c.l.b16 %v504
          %v1081 = vunpack.c.l.b16 %v505
          %v1082 = vunpack.c.l.b16 %v506
          %v1083 = vunpack.c.l.b16 %v507
          %v1084 = vunpack.c.l.b16 %v508
          %v1085 = vunpack.c.l.b16 %v509
          %v1086 = vunpack.c.l.b16 %v510
          %v1087 = vunpack.c.l.b16 %v511
          %v1088 = vunpack.c.l.b16 %v512
          %v1089 = vunpack.c.l.b16 %v513
          %v1090 = vunpack.c.l.b16 %v514
          %v1091 = vunpack.c.l.b16 %v515
          %v1092 = vunpack.c.l.b16 %v516
          %v1093 = vunpack.c.l.b16 %v517
          %v1094 = vunpack.c.l.b16 %v518
          %v1095 = vunpack.c.l.b16 %v519
          %v1096 = vunpack.c.l.b16 %v520
          %v1097 = vunpack.c.l.b16 %v521
          %v1098 = vunpack.c.l.b16 %v522
          %v1099 = vunpack.c.l.b16 %v523
          %v1100 = vunpack.c.l.b16 %v524
          %v1101 = vunpack.c.l.b16 %v525
          %v1102 = vunpack.c.l.b16 %v526
          %v1103 = vunpack.c.l.b16 %v527
          %v1104 = vunpack.c.l.b16 %v528
          %v1105 = vunpack.c.l.b16 %v529
          %v1106 = vunpack.c.l.b16 %v530
          %v1107 = vunpack.c.l.b16 %v531
          %v1108 = vunpack.c.l.b16 %v532
          %v1109 = vpack.c.b16 %v982, %v981
          %v1110 = vpack.c.b16 %v984, %v983
          %v1111 = vpack.c.b16 %v986, %v985
          %v1112 = vpack.c.b16 %v988, %v987
          %v1113 = vpack.c.b16 %v990, %v989
          %v1114 = vpack.c.b16 %v992, %v991
          %v1115 = vpack.c.b16 %v994, %v993
          %v1116 = vpack.c.b16 %v996, %v995
          %v1117 = vpack.c.b16 %v998, %v997
          %v1118 = vpack.c.b16 %v1000, %v999
          %v1119 = vpack.c.b16 %v1002, %v1001
          %v1120 = vpack.c.b16 %v1004, %v1003
          %v1121 = vpack.c.b16 %v1006, %v1005
          %v1122 = vpack.c.b16 %v1008, %v1007
          %v1123 = vpack.c.b16 %v1010, %v1009
          %v1124 = vpack.c.b16 %v1012, %v1011
          %v1125 = vpack.c.b16 %v1014, %v1013
          %v1126 = vpack.c.b16 %v1016, %v1015
          %v1127 = vpack.c.b16 %v1018, %v1017
          %v1128 = vpack.c.b16 %v1020, %v1019
          %v1129 = vpack.c.b16 %v1022, %v1021
          %v1130 = vpack.c.b16 %v1024, %v1023
          %v1131 = vpack.c.b16 %v1026, %v1025
          %v1132 = vpack.c.b16 %v1028, %v1027
          %v1133 = vpack.c.b16 %v1030, %v1029
          %v1134 = vpack.c.b16 %v1032, %v1031
          %v1135 = vpack.c.b16 %v1034, %v1033
          %v1136 = vpack.c.b16 %v1036, %v1035
          %v1137 = vpack.c.b16 %v1038, %v1037
          %v1138 = vpack.c.b16 %v1040, %v1039
          %v1139 = vpack.c.b16 %v1042, %v1041
          %v1140 = vpack.c.b16 %v1044, %v1043
          %v1141 = vpack.c.b16 %v1046, %v1045
          %v1142 = vpack.c.b16 %v1048, %v1047
          %v1143 = vpack.c.b16 %v1050, %v1049
          %v1144 = vpack.c.b16 %v1052, %v1051
          %v1145 = vpack.c.b16 %v1054, %v1053
          %v1146 = vpack.c.b16 %v1056, %v1055
          %v1147 = vpack.c.b16 %v1058, %v1057
          %v1148 = vpack.c.b16 %v1060, %v1059
          %v1149 = vpack.c.b16 %v1062, %v1061
          %v1150 = vpack.c.b16 %v1064, %v1063
          %v1151 = vpack.c.b16 %v1066, %v1065
          %v1152 = vpack.c.b16 %v1068, %v1067
          %v1153 = vpack.c.b16 %v1070, %v1069
          %v1154 = vpack.c.b16 %v1072, %v1071
          %v1155 = vpack.c.b16 %v1074, %v1073
          %v1156 = vpack.c.b16 %v1076, %v1075
          %v1157 = vpack.c.b16 %v1078, %v1077
          %v1158 = vpack.c.b16 %v1080, %v1079
          %v1159 = vpack.c.b16 %v1082, %v1081
          %v1160 = vpack.c.b16 %v1084, %v1083
          %v1161 = vpack.c.b16 %v1086, %v1085
          %v1162 = vpack.c.b16 %v1088, %v1087
          %v1163 = vpack.c.b16 %v1090, %v1089
          %v1164 = vpack.c.b16 %v1092, %v1091
          %v1165 = vpack.c.b16 %v1094, %v1093
          %v1166 = vpack.c.b16 %v1096, %v1095
          %v1167 = vpack.c.b16 %v1098, %v1097
          %v1168 = vpack.c.b16 %v1100, %v1099
          %v1169 = vpack.c.b16 %v1102, %v1101
          %v1170 = vpack.c.b16 %v1104, %v1103
          %v1171 = vpack.c.b16 %v1106, %v1105
          %v1172 = vpack.c.b16 %v1108, %v1107
          %1237 = vmatprep.subr.bf16.mxu0 0
          %1238 = vmatpush1.bf16.msra.mxu0 %v1109
          %1239 = vmatprep.subr.bf16.mxu0 0
          %1240 = vmatpush1.bf16.msra.mxu0 %v1110
          %1241 = vmatprep.subr.bf16.mxu0 0
          %1242 = vmatpush1.bf16.msra.mxu0 %v1111
          %1243 = vmatprep.subr.bf16.mxu0 0
          %1244 = vmatpush1.bf16.msra.mxu0 %v1112
          %1245 = vmatprep.subr.bf16.mxu0 0
          %1246 = vmatpush1.bf16.msra.mxu0 %v1113
          %1247 = vmatprep.subr.bf16.mxu0 0
          %1248 = vmatpush1.bf16.msra.mxu0 %v1114
          %1249 = vmatprep.subr.bf16.mxu0 0
          %1250 = vmatpush1.bf16.msra.mxu0 %v1115
          %1251 = vmatprep.subr.bf16.mxu0 0
          %1252 = vmatpush1.bf16.msra.mxu0 %v1116
          %1253 = vmatprep.subr.bf16.mxu0 0
          %1254 = vmatpush1.bf16.msra.mxu0 %v1117
          %1255 = vmatprep.subr.bf16.mxu0 0
          %1256 = vmatpush1.bf16.msra.mxu0 %v1118
          %1257 = vmatprep.subr.bf16.mxu0 0
          %1258 = vmatpush1.bf16.msra.mxu0 %v1119
          %1259 = vmatprep.subr.bf16.mxu0 0
          %1260 = vmatpush1.bf16.msra.mxu0 %v1120
          %1261 = vmatprep.subr.bf16.mxu0 0
          %1262 = vmatpush1.bf16.msra.mxu0 %v1121
          %1263 = vmatprep.subr.bf16.mxu0 0
          %1264 = vmatpush1.bf16.msra.mxu0 %v1122
          %1265 = vmatprep.subr.bf16.mxu0 0
          %1266 = vmatpush1.bf16.msra.mxu0 %v1123
          %1267 = vmatprep.subr.bf16.mxu0 0
          %1268 = vmatpush1.bf16.msra.mxu0 %v1124
          %1269 = vmatprep.mubr.bf16.mxu0 %v726
          %1270 = vmatmul.mubr.bf16.gmra.mrb[0].mxu0 %v725
          %v1271 = vpop.f32.mrb[0].mxu0
          %v1272 = vadd.f32 0.0, %v1271
          %v1273 = vpop.f32.mrb[0].mxu0
          %v1274 = vpop.f32.mrb[0].mxu0
          %v1275 = vadd.f32 0.0, %v1274
          %v1276 = vpop.f32.mrb[0].mxu0
          %1277 = vmatprep.mubr.bf16.mxu0 %v734
          %1278 = vmatmul.mubr.bf16.gmra.mrb[0].mxu0 %v733
          %v1279 = vpop.f32.mrb[0].mxu0
          %v1280 = vadd.f32 0.0, %v1279
          %v1281 = vpop.f32.mrb[0].mxu0
          %v1282 = vpop.f32.mrb[0].mxu0
          %v1283 = vadd.f32 0.0, %v1282
          %v1284 = vpop.f32.mrb[0].mxu0
          %1285 = vmatprep.mubr.bf16.mxu0 %v742
          %1286 = vmatmul.mubr.bf16.gmra.mrb[0].mxu0 %v741
          %v1287 = vpop.f32.mrb[0].mxu0
          %v1288 = vadd.f32 0.0, %v1287
          %v1289 = vpop.f32.mrb[0].mxu0
          %v1290 = vpop.f32.mrb[0].mxu0
          %v1291 = vadd.f32 0.0, %v1290
          %v1292 = vpop.f32.mrb[0].mxu0
          %1293 = vmatprep.mubr.bf16.mxu0 %v750
          %1294 = vmatmul.mubr.bf16.gmra.mrb[0].mxu0 %v749
          %v1295 = vpop.f32.mrb[0].mxu0
          %v1296 = vadd.f32 0.0, %v1295
          %v1297 = vpop.f32.mrb[0].mxu0
          %v1298 = vpop.f32.mrb[0].mxu0
          %v1299 = vadd.f32 0.0, %v1298
          %v1300 = vpop.f32.mrb[0].mxu0
          %1301 = vmatprep.mubr.bf16.mxu0 %v758
          %1302 = vmatmul.mubr.bf16.gmra.mrb[0].mxu0 %v757
          %v1303 = vpop.f32.mrb[0].mxu0
          %v1304 = vadd.f32 0.0, %v1303
          %v1305 = vpop.f32.mrb[0].mxu0
          %v1306 = vpop.f32.mrb[0].mxu0
          %v1307 = vadd.f32 0.0, %v1306
          %v1308 = vpop.f32.mrb[0].mxu0
          %1309 = vmatprep.mubr.bf16.mxu0 %v766
          %1310 = vmatmul.mubr.bf16.gmra.mrb[0].mxu0 %v765
          %v1311 = vpop.f32.mrb[0].mxu0
          %v1312 = vadd.f32 0.0, %v1311
          %v1313 = vpop.f32.mrb[0].mxu0
          %v1314 = vpop.f32.mrb[0].mxu0
          %v1315 = vadd.f32 0.0, %v1314
          %v1316 = vpop.f32.mrb[0].mxu0
          %1317 = vmatprep.mubr.bf16.mxu0 %v774
          %1318 = vmatmul.mubr.bf16.gmra.mrb[0].mxu0 %v773
          %v1319 = vpop.f32.mrb[0].mxu0
          %v1320 = vadd.f32 0.0, %v1319
          %v1321 = vpop.f32.mrb[0].mxu0
          %v1322 = vpop.f32.mrb[0].mxu0
          %v1323 = vadd.f32 0.0, %v1322
          %v1324 = vpop.f32.mrb[0].mxu0
          %1325 = vmatprep.mubr.bf16.mxu0 %v782
          %1326 = vmatmul.mubr.bf16.gmra.mrb[0].mxu0 %v781
          %v1327 = vpop.f32.mrb[0].mxu0
          %v1328 = vadd.f32 0.0, %v1327
          %v1329 = vpop.f32.mrb[0].mxu0
          %v1330 = vpop.f32.mrb[0].mxu0
          %v1331 = vadd.f32 0.0, %v1330
          %v1332 = vpop.f32.mrb[0].mxu0
          %1333 = vdwg.mxu0
          %1334 = vmatprep.subr.bf16.mxu0 0
          %1335 = vmatpush1.bf16.msra.mxu0 %v1125
          %1336 = vmatprep.subr.bf16.mxu0 0
          %1337 = vmatpush1.bf16.msra.mxu0 %v1126
          %1338 = vmatprep.subr.bf16.mxu0 0
          %1339 = vmatpush1.bf16.msra.mxu0 %v1127
          %1340 = vmatprep.subr.bf16.mxu0 0
          %1341 = vmatpush1.bf16.msra.mxu0 %v1128
          %1342 = vmatprep.subr.bf16.mxu0 0
          %1343 = vmatpush1.bf16.msra.mxu0 %v1129
          %1344 = vmatprep.subr.bf16.mxu0 0
          %1345 = vmatpush1.bf16.msra.mxu0 %v1130
          %1346 = vmatprep.subr.bf16.mxu0 0
          %1347 = vmatpush1.bf16.msra.mxu0 %v1131
          %1348 = vmatprep.subr.bf16.mxu0 0
          %1349 = vmatpush1.bf16.msra.mxu0 %v1132
          %1350 = vmatprep.subr.bf16.mxu0 0
          %1351 = vmatpush1.bf16.msra.mxu0 %v1133
          %1352 = vmatprep.subr.bf16.mxu0 0
          %1353 = vmatpush1.bf16.msra.mxu0 %v1134
          %1354 = vmatprep.subr.bf16.mxu0 0
          %1355 = vmatpush1.bf16.msra.mxu0 %v1135
          %1356 = vmatprep.subr.bf16.mxu0 0
          %1357 = vmatpush1.bf16.msra.mxu0 %v1136
          %1358 = vmatprep.subr.bf16.mxu0 0
          %1359 = vmatpush1.bf16.msra.mxu0 %v1137
          %1360 = vmatprep.subr.bf16.mxu0 0
          %1361 = vmatpush1.bf16.msra.mxu0 %v1138
          %1362 = vmatprep.subr.bf16.mxu0 0
          %1363 = vmatpush1.bf16.msra.mxu0 %v1139
          %1364 = vmatprep.subr.bf16.mxu0 0
          %1365 = vmatpush1.bf16.msra.mxu0 %v1140
          %1366 = vmatprep.mubr.bf16.mxu0 %v728
          %1367 = vmatmul.mubr.bf16.gmra.mrb[0].mxu0 %v727
          %v1368 = vpop.f32.mrb[0].mxu0
          %v1369 = vadd.f32 %v1272, %v1368
          %v1370 = vpop.f32.mrb[0].mxu0
          %v1371 = vpop.f32.mrb[0].mxu0
          %v1372 = vadd.f32 %v1275, %v1371
          %v1373 = vpop.f32.mrb[0].mxu0
          %1374 = vmatprep.mubr.bf16.mxu0 %v736
          %1375 = vmatmul.mubr.bf16.gmra.mrb[0].mxu0 %v735
          %v1376 = vpop.f32.mrb[0].mxu0
          %v1377 = vadd.f32 %v1280, %v1376
          %v1378 = vpop.f32.mrb[0].mxu0
          %v1379 = vpop.f32.mrb[0].mxu0
          %v1380 = vadd.f32 %v1283, %v1379
          %v1381 = vpop.f32.mrb[0].mxu0
          %1382 = vmatprep.mubr.bf16.mxu0 %v744
          %1383 = vmatmul.mubr.bf16.gmra.mrb[0].mxu0 %v743
          %v1384 = vpop.f32.mrb[0].mxu0
          %v1385 = vadd.f32 %v1288, %v1384
          %v1386 = vpop.f32.mrb[0].mxu0
          %v1387 = vpop.f32.mrb[0].mxu0
          %v1388 = vadd.f32 %v1291, %v1387
          %v1389 = vpop.f32.mrb[0].mxu0
          %1390 = vmatprep.mubr.bf16.mxu0 %v752
          %1391 = vmatmul.mubr.bf16.gmra.mrb[0].mxu0 %v751
          %v1392 = vpop.f32.mrb[0].mxu0
          %v1393 = vadd.f32 %v1296, %v1392
          %v1394 = vpop.f32.mrb[0].mxu0
          %v1395 = vpop.f32.mrb[0].mxu0
          %v1396 = vadd.f32 %v1299, %v1395
          %v1397 = vpop.f32.mrb[0].mxu0
          %1398 = vmatprep.mubr.bf16.mxu0 %v760
          %1399 = vmatmul.mubr.bf16.gmra.mrb[0].mxu0 %v759
          %v1400 = vpop.f32.mrb[0].mxu0
          %v1401 = vadd.f32 %v1304, %v1400
          %v1402 = vpop.f32.mrb[0].mxu0
          %v1403 = vpop.f32.mrb[0].mxu0
          %v1404 = vadd.f32 %v1307, %v1403
          %v1405 = vpop.f32.mrb[0].mxu0
          %1406 = vmatprep.mubr.bf16.mxu0 %v768
          %1407 = vmatmul.mubr.bf16.gmra.mrb[0].mxu0 %v767
          %v1408 = vpop.f32.mrb[0].mxu0
          %v1409 = vadd.f32 %v1312, %v1408
          %v1410 = vpop.f32.mrb[0].mxu0
          %v1411 = vpop.f32.mrb[0].mxu0
          %v1412 = vadd.f32 %v1315, %v1411
          %v1413 = vpop.f32.mrb[0].mxu0
          %1414 = vmatprep.mubr.bf16.mxu0 %v776
          %1415 = vmatmul.mubr.bf16.gmra.mrb[0].mxu0 %v775
          %v1416 = vpop.f32.mrb[0].mxu0
          %v1417 = vadd.f32 %v1320, %v1416
          %v1418 = vpop.f32.mrb[0].mxu0
          %v1419 = vpop.f32.mrb[0].mxu0
          %v1420 = vadd.f32 %v1323, %v1419
          %v1421 = vpop.f32.mrb[0].mxu0
          %1422 = vmatprep.mubr.bf16.mxu0 %v784
          %1423 = vmatmul.mubr.bf16.gmra.mrb[0].mxu0 %v783
          %v1424 = vpop.f32.mrb[0].mxu0
          %v1425 = vadd.f32 %v1328, %v1424
          %v1426 = vpop.f32.mrb[0].mxu0
          %v1427 = vpop.f32.mrb[0].mxu0
          %v1428 = vadd.f32 %v1331, %v1427
          %v1429 = vpop.f32.mrb[0].mxu0
          %1430 = vdwg.mxu0
          %1431 = vmatprep.subr.bf16.mxu0 0
          %1432 = vmatpush1.bf16.msra.mxu0 %v1141
          %1433 = vmatprep.subr.bf16.mxu0 0
          %1434 = vmatpush1.bf16.msra.mxu0 %v1142
          %1435 = vmatprep.subr.bf16.mxu0 0
          %1436 = vmatpush1.bf16.msra.mxu0 %v1143
          %1437 = vmatprep.subr.bf16.mxu0 0
          %1438 = vmatpush1.bf16.msra.mxu0 %v1144
          %1439 = vmatprep.subr.bf16.mxu0 0
          %1440 = vmatpush1.bf16.msra.mxu0 %v1145
          %1441 = vmatprep.subr.bf16.mxu0 0
          %1442 = vmatpush1.bf16.msra.mxu0 %v1146
          %1443 = vmatprep.subr.bf16.mxu0 0
          %1444 = vmatpush1.bf16.msra.mxu0 %v1147
          %1445 = vmatprep.subr.bf16.mxu0 0
          %1446 = vmatpush1.bf16.msra.mxu0 %v1148
          %1447 = vmatprep.subr.bf16.mxu0 0
          %1448 = vmatpush1.bf16.msra.mxu0 %v1149
          %1449 = vmatprep.subr.bf16.mxu0 0
          %1450 = vmatpush1.bf16.msra.mxu0 %v1150
          %1451 = vmatprep.subr.bf16.mxu0 0
          %1452 = vmatpush1.bf16.msra.mxu0 %v1151
          %1453 = vmatprep.subr.bf16.mxu0 0
          %1454 = vmatpush1.bf16.msra.mxu0 %v1152
          %1455 = vmatprep.subr.bf16.mxu0 0
          %1456 = vmatpush1.bf16.msra.mxu0 %v1153
          %1457 = vmatprep.subr.bf16.mxu0 0
          %1458 = vmatpush1.bf16.msra.mxu0 %v1154
          %1459 = vmatprep.subr.bf16.mxu0 0
          %1460 = vmatpush1.bf16.msra.mxu0 %v1155
          %1461 = vmatprep.subr.bf16.mxu0 0
          %1462 = vmatpush1.bf16.msra.mxu0 %v1156
          %1463 = vmatprep.mubr.bf16.mxu0 %v730
          %1464 = vmatmul.mubr.bf16.gmra.mrb[0].mxu0 %v729
          %v1465 = vpop.f32.mrb[0].mxu0
          %v1466 = vadd.f32 %v1369, %v1465
          %v1467 = vpop.f32.mrb[0].mxu0
          %v1468 = vpop.f32.mrb[0].mxu0
          %v1469 = vadd.f32 %v1372, %v1468
          %v1470 = vpop.f32.mrb[0].mxu0
          %1471 = vmatprep.mubr.bf16.mxu0 %v738
          %1472 = vmatmul.mubr.bf16.gmra.mrb[0].mxu0 %v737
          %v1473 = vpop.f32.mrb[0].mxu0
          %v1474 = vadd.f32 %v1377, %v1473
          %v1475 = vpop.f32.mrb[0].mxu0
          %v1476 = vpop.f32.mrb[0].mxu0
          %v1477 = vadd.f32 %v1380, %v1476
          %v1478 = vpop.f32.mrb[0].mxu0
          %1479 = vmatprep.mubr.bf16.mxu0 %v746
          %1480 = vmatmul.mubr.bf16.gmra.mrb[0].mxu0 %v745
          %v1481 = vpop.f32.mrb[0].mxu0
          %v1482 = vadd.f32 %v1385, %v1481
          %v1483 = vpop.f32.mrb[0].mxu0
          %v1484 = vpop.f32.mrb[0].mxu0
          %v1485 = vadd.f32 %v1388, %v1484
          %v1486 = vpop.f32.mrb[0].mxu0
          %1487 = vmatprep.mubr.bf16.mxu0 %v754
          %1488 = vmatmul.mubr.bf16.gmra.mrb[0].mxu0 %v753
          %v1489 = vpop.f32.mrb[0].mxu0
          %v1490 = vadd.f32 %v1393, %v1489
          %v1491 = vpop.f32.mrb[0].mxu0
          %v1492 = vpop.f32.mrb[0].mxu0
          %v1493 = vadd.f32 %v1396, %v1492
          %v1494 = vpop.f32.mrb[0].mxu0
          %1495 = vmatprep.mubr.bf16.mxu0 %v762
          %1496 = vmatmul.mubr.bf16.gmra.mrb[0].mxu0 %v761
          %v1497 = vpop.f32.mrb[0].mxu0
          %v1498 = vadd.f32 %v1401, %v1497
          %v1499 = vpop.f32.mrb[0].mxu0
          %v1500 = vpop.f32.mrb[0].mxu0
          %v1501 = vadd.f32 %v1404, %v1500
          %v1502 = vpop.f32.mrb[0].mxu0
          %1503 = vmatprep.mubr.bf16.mxu0 %v770
          %1504 = vmatmul.mubr.bf16.gmra.mrb[0].mxu0 %v769
          %v1505 = vpop.f32.mrb[0].mxu0
          %v1506 = vadd.f32 %v1409, %v1505
          %v1507 = vpop.f32.mrb[0].mxu0
          %v1508 = vpop.f32.mrb[0].mxu0
          %v1509 = vadd.f32 %v1412, %v1508
          %v1510 = vpop.f32.mrb[0].mxu0
          %1511 = vmatprep.mubr.bf16.mxu0 %v778
          %1512 = vmatmul.mubr.bf16.gmra.mrb[0].mxu0 %v777
          %v1513 = vpop.f32.mrb[0].mxu0
          %v1514 = vadd.f32 %v1417, %v1513
          %v1515 = vpop.f32.mrb[0].mxu0
          %v1516 = vpop.f32.mrb[0].mxu0
          %v1517 = vadd.f32 %v1420, %v1516
          %v1518 = vpop.f32.mrb[0].mxu0
          %1519 = vmatprep.mubr.bf16.mxu0 %v786
          %1520 = vmatmul.mubr.bf16.gmra.mrb[0].mxu0 %v785
          %v1521 = vpop.f32.mrb[0].mxu0
          %v1522 = vadd.f32 %v1425, %v1521
          %v1523 = vpop.f32.mrb[0].mxu0
          %v1524 = vpop.f32.mrb[0].mxu0
          %v1525 = vadd.f32 %v1428, %v1524
          %v1526 = vpop.f32.mrb[0].mxu0
          %1527 = vdwg.mxu0
          %1528 = vmatprep.subr.bf16.mxu0 0
          %1529 = vmatpush1.bf16.msra.mxu0 %v1157
          %1530 = vmatprep.subr.bf16.mxu0 0
          %1531 = vmatpush1.bf16.msra.mxu0 %v1158
          %1532 = vmatprep.subr.bf16.mxu0 0
          %1533 = vmatpush1.bf16.msra.mxu0 %v1159
          %1534 = vmatprep.subr.bf16.mxu0 0
          %1535 = vmatpush1.bf16.msra.mxu0 %v1160
          %1536 = vmatprep.subr.bf16.mxu0 0
          %1537 = vmatpush1.bf16.msra.mxu0 %v1161
          %1538 = vmatprep.subr.bf16.mxu0 0
          %1539 = vmatpush1.bf16.msra.mxu0 %v1162
          %1540 = vmatprep.subr.bf16.mxu0 0
          %1541 = vmatpush1.bf16.msra.mxu0 %v1163
          %1542 = vmatprep.subr.bf16.mxu0 0
          %1543 = vmatpush1.bf16.msra.mxu0 %v1164
          %1544 = vmatprep.subr.bf16.mxu0 0
          %1545 = vmatpush1.bf16.msra.mxu0 %v1165
          %1546 = vmatprep.subr.bf16.mxu0 0
          %1547 = vmatpush1.bf16.msra.mxu0 %v1166
          %1548 = vmatprep.subr.bf16.mxu0 0
          %1549 = vmatpush1.bf16.msra.mxu0 %v1167
          %1550 = vmatprep.subr.bf16.mxu0 0
          %1551 = vmatpush1.bf16.msra.mxu0 %v1168
          %1552 = vmatprep.subr.bf16.mxu0 0
          %1553 = vmatpush1.bf16.msra.mxu0 %v1169
          %1554 = vmatprep.subr.bf16.mxu0 0
          %1555 = vmatpush1.bf16.msra.mxu0 %v1170
          %1556 = vmatprep.subr.bf16.mxu0 0
          %1557 = vmatpush1.bf16.msra.mxu0 %v1171
          %1558 = vmatprep.subr.bf16.mxu0 0
          %1559 = vmatpush1.bf16.msra.mxu0 %v1172
          %1560 = vmatprep.mubr.bf16.mxu0 %v732
          %1561 = vmatmul.mubr.bf16.gmra.mrb[0].mxu0 %v731
          %v1562 = vpop.f32.mrb[0].mxu0
          %v1563 = vadd.f32 %v1466, %v1562
          %v1564 = vpop.f32.mrb[0].mxu0
          %v1565 = vpop.f32.mrb[0].mxu0
          %v1566 = vadd.f32 %v1469, %v1565
          %v1567 = vpop.f32.mrb[0].mxu0
          %1568 = vmatprep.mubr.bf16.mxu0 %v740
          %1569 = vmatmul.mubr.bf16.gmra.mrb[0].mxu0 %v739
          %v1570 = vpop.f32.mrb[0].mxu0
          %v1571 = vadd.f32 %v1474, %v1570
          %v1572 = vpop.f32.mrb[0].mxu0
          %v1573 = vpop.f32.mrb[0].mxu0
          %v1574 = vadd.f32 %v1477, %v1573
          %v1575 = vpop.f32.mrb[0].mxu0
          %1576 = vmatprep.mubr.bf16.mxu0 %v748
          %1577 = vmatmul.mubr.bf16.gmra.mrb[0].mxu0 %v747
          %v1578 = vpop.f32.mrb[0].mxu0
          %v1579 = vadd.f32 %v1482, %v1578
          %v1580 = vpop.f32.mrb[0].mxu0
          %v1581 = vpop.f32.mrb[0].mxu0
          %v1582 = vadd.f32 %v1485, %v1581
          %v1583 = vpop.f32.mrb[0].mxu0
          %1584 = vmatprep.mubr.bf16.mxu0 %v756
          %1585 = vmatmul.mubr.bf16.gmra.mrb[0].mxu0 %v755
          %v1586 = vpop.f32.mrb[0].mxu0
          %v1587 = vadd.f32 %v1490, %v1586
          %v1588 = vpop.f32.mrb[0].mxu0
          %v1589 = vpop.f32.mrb[0].mxu0
          %v1590 = vadd.f32 %v1493, %v1589
          %v1591 = vpop.f32.mrb[0].mxu0
          %1592 = vmatprep.mubr.bf16.mxu0 %v764
          %1593 = vmatmul.mubr.bf16.gmra.mrb[0].mxu0 %v763
          %v1594 = vpop.f32.mrb[0].mxu0
          %v1595 = vadd.f32 %v1498, %v1594
          %v1596 = vpop.f32.mrb[0].mxu0
          %v1597 = vpop.f32.mrb[0].mxu0
          %v1598 = vadd.f32 %v1501, %v1597
          %v1599 = vpop.f32.mrb[0].mxu0
          %1600 = vmatprep.mubr.bf16.mxu0 %v772
          %1601 = vmatmul.mubr.bf16.gmra.mrb[0].mxu0 %v771
          %v1602 = vpop.f32.mrb[0].mxu0
          %v1603 = vadd.f32 %v1506, %v1602
          %v1604 = vpop.f32.mrb[0].mxu0
          %v1605 = vpop.f32.mrb[0].mxu0
          %v1606 = vadd.f32 %v1509, %v1605
          %v1607 = vpop.f32.mrb[0].mxu0
          %1608 = vmatprep.mubr.bf16.mxu0 %v780
          %1609 = vmatmul.mubr.bf16.gmra.mrb[0].mxu0 %v779
          %v1610 = vpop.f32.mrb[0].mxu0
          %v1611 = vadd.f32 %v1514, %v1610
          %v1612 = vpop.f32.mrb[0].mxu0
          %v1613 = vpop.f32.mrb[0].mxu0
          %v1614 = vadd.f32 %v1517, %v1613
          %v1615 = vpop.f32.mrb[0].mxu0
          %1616 = vmatprep.mubr.bf16.mxu0 %v788
          %1617 = vmatmul.mubr.bf16.gmra.mrb[0].mxu0 %v787
          %v1618 = vpop.f32.mrb[0].mxu0
          %v1619 = vadd.f32 %v1522, %v1618
          %v1620 = vpop.f32.mrb[0].mxu0
          %v1621 = vpop.f32.mrb[0].mxu0
          %v1622 = vadd.f32 %v1525, %v1621
          %v1623 = vpop.f32.mrb[0].mxu0
          %1624 = vdwg.mxu0
          %v1625 = vpack.c.bf16 %v1566, %v1563
          %v1626 = vpack.c.bf16 %v1574, %v1571
          %v1627 = vpack.c.bf16 %v1582, %v1579
          %v1628 = vpack.c.bf16 %v1590, %v1587
          %v1629 = vpack.c.bf16 %v1598, %v1595
          %v1630 = vpack.c.bf16 %v1606, %v1603
          %v1631 = vpack.c.bf16 %v1614, %v1611
          %v1632 = vpack.c.bf16 %v1622, %v1619
          %s1633 = sshra.s32 %s330, 4
          %s1634 = sand.u32 %s330, 15
          %s1635 = smul.addr %s1633, 8
          %s1636 = scalar_lea.vmem [#allocation2], %s1635
          %1637 = vst [vmem:[%s1636] sm:$0xff] %v1625
          %1638 = vst [vmem:[%s1636 + $0x8] sm:$0xff] %v1626
          %1639 = vst [vmem:[%s1636 + $0x10] sm:$0xff] %v1627
          %1640 = vst [vmem:[%s1636 + $0x18] sm:$0xff] %v1628
          %1641 = vst [vmem:[%s1636 + $0x20] sm:$0xff] %v1629
          %1642 = vst [vmem:[%s1636 + $0x28] sm:$0xff] %v1630
          %1643 = vst [vmem:[%s1636 + $0x30] sm:$0xff] %v1631
          %1644 = vst [vmem:[%s1636 + $0x38] sm:$0xff] %v1632
          %v1645 = vmul.f32 %v1563, %v1563
          %v1646 = vmul.f32 %v1566, %v1566
          %v1647 = vmul.f32 %v1571, %v1571
          %v1648 = vmul.f32 %v1574, %v1574
          %v1649 = vmul.f32 %v1579, %v1579
          %v1650 = vmul.f32 %v1582, %v1582
          %v1651 = vmul.f32 %v1587, %v1587
          %v1652 = vmul.f32 %v1590, %v1590
          %v1653 = vmul.f32 %v1595, %v1595
          %v1654 = vmul.f32 %v1598, %v1598
          %v1655 = vmul.f32 %v1603, %v1603
          %v1656 = vmul.f32 %v1606, %v1606
          %v1657 = vmul.f32 %v1611, %v1611
          %v1658 = vmul.f32 %v1614, %v1614
          %v1659 = vmul.f32 %v1619, %v1619
          %v1660 = vmul.f32 %v1622, %v1622
          %v1661 = vld [vmem:[#allocation3] sm:$0xff]
          %v1662 = vadd.f32 %v1563, %v1566
          %v1663 = vadd.f32 %v1662, %v1571
          %v1664 = vadd.f32 %v1663, %v1574
          %v1665 = vadd.f32 %v1664, %v1579
          %v1666 = vadd.f32 %v1665, %v1582
          %v1667 = vadd.f32 %v1666, %v1587
          %v1668 = vadd.f32 %v1667, %v1590
          %v1669 = vadd.f32 %v1668, %v1595
          %v1670 = vadd.f32 %v1669, %v1598
          %v1671 = vadd.f32 %v1670, %v1603
          %v1672 = vadd.f32 %v1671, %v1606
          %v1673 = vadd.f32 %v1672, %v1611
          %v1674 = vadd.f32 %v1673, %v1614
          %v1675 = vadd.f32 %v1674, %v1619
          %v1676 = vadd.f32 %v1675, %v1622
          %v1677 = vadd.f32 %v1661, %v1676
          %1678 = vst [vmem:[#allocation3] sm:$0xff] %v1677
          %v1679 = vld [vmem:[#allocation3 + $0x8] sm:$0xff]
          %v1680 = vadd.f32 %v1645, %v1646
          %v1681 = vadd.f32 %v1680, %v1647
          %v1682 = vadd.f32 %v1681, %v1648
          %v1683 = vadd.f32 %v1682, %v1649
          %v1684 = vadd.f32 %v1683, %v1650
          %v1685 = vadd.f32 %v1684, %v1651
          %v1686 = vadd.f32 %v1685, %v1652
          %v1687 = vadd.f32 %v1686, %v1653
          %v1688 = vadd.f32 %v1687, %v1654
          %v1689 = vadd.f32 %v1688, %v1655
          %v1690 = vadd.f32 %v1689, %v1656
          %v1691 = vadd.f32 %v1690, %v1657
          %v1692 = vadd.f32 %v1691, %v1658
          %v1693 = vadd.f32 %v1692, %v1659
          %v1694 = vadd.f32 %v1693, %v1660
          %v1695 = vadd.f32 %v1679, %v1694
          %1696 = vst [vmem:[#allocation3 + $0x8] sm:$0xff] %v1695
        $region60: #{tpu_custom_call.1} parent=43 // pred_fallthru
          _
        %p1697 = scmp.eq.s32.totalorder %s28, 1
        // Predicated region
        $region65: #{tpu_custom_call.1} parent=43 // pred_check
          %p1698 = pneg %p1697
        $region66: #{tpu_custom_call.1} parent=43 // pred_check_branch
          %1700 = sbr.rel (%p1698) target = $region68
        $region67: #{tpu_custom_call.1} parent=43 // pred_region
          %p1701 = scmp.eq.s32.totalorder %s29, 0
          // Predicated region
          $region69: #{tpu_custom_call.1} parent=67 // pred_check
            %p1702 = pneg %p1701
          $region70: #{tpu_custom_call.1} parent=67 // pred_check_branch
            %1704 = sbr.rel (%p1702) target = $region72
          $region71: #{tpu_custom_call.1} parent=67 // pred_region
            %v1705 = vld [vmem:[#allocation3] sm:$0xff]
            %v1706 = vrot.slane %v1705, 4
            %v1707 = vadd.f32 %v1705, %v1706
            %v1708 = vrot.slane %v1707, 2
            %v1709 = vadd.f32 %v1707, %v1708
            %v1710 = vrot.slane %v1709, 1
            %v1711 = vadd.f32 %v1709, %v1710
            %v1712 = vld [vmem:[#allocation3 + $0x8] sm:$0xff]
            %v1713 = vrot.slane %v1712, 4
            %v1714 = vadd.f32 %v1712, %v1713
            %v1715 = vrot.slane %v1714, 2
            %v1716 = vadd.f32 %v1714, %v1715
            %v1717 = vrot.slane %v1716, 1
            %v1718 = vadd.f32 %v1716, %v1717
            %v1719 = vmul.f32 %v1711, 0.00390625
            %v1720 = vmul.f32 %v1718, 0.00390625
            %v1721 = vmul.f32 %v1719, %v1719
            %v1722 = vsub.f32 %v1720, %v1721
            %v1723 = vld [vmem:[%s2] sm:$0x1]
            %v1724 = vadd.f32 %v1722, 1e-05
            %v1725 = vrsqrt.pop %v1724
            %v1726 = vmul.f32 %v1723, %v1725
            %1727 = vst [vmem:[#allocation4] sm:$0x1] %v1726
            %v1728 = vld [vmem:[%s3] sm:$0x1]
            %v1729 = vmul.f32 %v1719, %v1726
            %v1730 = vsub.f32 %v1728, %v1729
            %1731 = vst [vmem:[#allocation4 + $0x1] sm:$0x1] %v1730
          $region72: #{tpu_custom_call.1} parent=67 // pred_fallthru
            _
          %s1732 = sshra.s32 %s330, 4
          %s1733 = sand.u32 %s330, 15
          %s1734 = smul.addr %s1732, 8
          %s1735 = scalar_lea.vmem [#allocation2], %s1734
          %v1736 = vld [vmem:[%s1735] sm:$0xff]
          %v1737 = vld [vmem:[%s1735 + $0x8] sm:$0xff]
          %v1738 = vld [vmem:[%s1735 + $0x10] sm:$0xff]
          %v1739 = vld [vmem:[%s1735 + $0x18] sm:$0xff]
          %v1740 = vld [vmem:[%s1735 + $0x20] sm:$0xff]
          %v1741 = vld [vmem:[%s1735 + $0x28] sm:$0xff]
          %v1742 = vld [vmem:[%s1735 + $0x30] sm:$0xff]
          %v1743 = vld [vmem:[%s1735 + $0x38] sm:$0xff]
          %v1744 = vunpack.c.l.bf16 %v1736
          %v1745 = vunpack.c.h.bf16 %v1736
          %v1746 = vunpack.c.l.bf16 %v1737
          %v1747 = vunpack.c.h.bf16 %v1737
          %v1748 = vunpack.c.l.bf16 %v1738
          %v1749 = vunpack.c.h.bf16 %v1738
          %v1750 = vunpack.c.l.bf16 %v1739
          %v1751 = vunpack.c.h.bf16 %v1739
          %v1752 = vunpack.c.l.bf16 %v1740
          %v1753 = vunpack.c.h.bf16 %v1740
          %v1754 = vunpack.c.l.bf16 %v1741
          %v1755 = vunpack.c.h.bf16 %v1741
          %v1756 = vunpack.c.l.bf16 %v1742
          %v1757 = vunpack.c.h.bf16 %v1742
          %v1758 = vunpack.c.l.bf16 %v1743
          %v1759 = vunpack.c.h.bf16 %v1743
          %v1760 = vld [vmem:[#allocation4] sm:$0x1]
          %v1761 = vlaneseq
          %v1762 = vshrl.u32 %v1761, 7
          %v1763 = vsub.s32 0, %v1762
          %v1764 = vrot.slane %v1760, %v1763
          %v1765 = vmul.f32 %v1744, %v1764
          %v1766 = vmul.f32 %v1745, %v1764
          %v1767 = vmul.f32 %v1746, %v1764
          %v1768 = vmul.f32 %v1747, %v1764
          %v1769 = vmul.f32 %v1748, %v1764
          %v1770 = vmul.f32 %v1749, %v1764
          %v1771 = vmul.f32 %v1750, %v1764
          %v1772 = vmul.f32 %v1751, %v1764
          %v1773 = vmul.f32 %v1752, %v1764
          %v1774 = vmul.f32 %v1753, %v1764
          %v1775 = vmul.f32 %v1754, %v1764
          %v1776 = vmul.f32 %v1755, %v1764
          %v1777 = vmul.f32 %v1756, %v1764
          %v1778 = vmul.f32 %v1757, %v1764
          %v1779 = vmul.f32 %v1758, %v1764
          %v1780 = vmul.f32 %v1759, %v1764
          %v1781 = vld [vmem:[#allocation4 + $0x1] sm:$0x1]
          %v1782 = vlaneseq
          %v1783 = vshrl.u32 %v1782, 7
          %v1784 = vsub.s32 0, %v1783
          %v1785 = vrot.slane %v1781, %v1784
          %v1786 = vadd.f32 %v1765, %v1785
          %v1787 = vadd.f32 %v1766, %v1785
          %v1788 = vadd.f32 %v1767, %v1785
          %v1789 = vadd.f32 %v1768, %v1785
          %v1790 = vadd.f32 %v1769, %v1785
          %v1791 = vadd.f32 %v1770, %v1785
          %v1792 = vadd.f32 %v1771, %v1785
          %v1793 = vadd.f32 %v1772, %v1785
          %v1794 = vadd.f32 %v1773, %v1785
          %v1795 = vadd.f32 %v1774, %v1785
          %v1796 = vadd.f32 %v1775, %v1785
          %v1797 = vadd.f32 %v1776, %v1785
          %v1798 = vadd.f32 %v1777, %v1785
          %v1799 = vadd.f32 %v1778, %v1785
          %v1800 = vadd.f32 %v1779, %v1785
          %v1801 = vadd.f32 %v1780, %v1785
          %vm1802 = vcmp.gt.f32.partialorder %v1786, 0.0
          %vm1803 = vcmp.gt.f32.partialorder %v1787, 0.0
          %vm1804 = vcmp.gt.f32.partialorder %v1788, 0.0
          %vm1805 = vcmp.gt.f32.partialorder %v1789, 0.0
          %vm1806 = vcmp.gt.f32.partialorder %v1790, 0.0
          %vm1807 = vcmp.gt.f32.partialorder %v1791, 0.0
          %vm1808 = vcmp.gt.f32.partialorder %v1792, 0.0
          %vm1809 = vcmp.gt.f32.partialorder %v1793, 0.0
          %vm1810 = vcmp.gt.f32.partialorder %v1794, 0.0
          %vm1811 = vcmp.gt.f32.partialorder %v1795, 0.0
          %vm1812 = vcmp.gt.f32.partialorder %v1796, 0.0
          %vm1813 = vcmp.gt.f32.partialorder %v1797, 0.0
          %vm1814 = vcmp.gt.f32.partialorder %v1798, 0.0
          %vm1815 = vcmp.gt.f32.partialorder %v1799, 0.0
          %vm1816 = vcmp.gt.f32.partialorder %v1800, 0.0
          %vm1817 = vcmp.gt.f32.partialorder %v1801, 0.0
          %v1818 = vmul.f32 %v1786, 0.1
          %v1819 = vmul.f32 %v1787, 0.1
          %v1820 = vmul.f32 %v1788, 0.1
          %v1821 = vmul.f32 %v1789, 0.1
          %v1822 = vmul.f32 %v1790, 0.1
          %v1823 = vmul.f32 %v1791, 0.1
          %v1824 = vmul.f32 %v1792, 0.1
          %v1825 = vmul.f32 %v1793, 0.1
          %v1826 = vmul.f32 %v1794, 0.1
          %v1827 = vmul.f32 %v1795, 0.1
          %v1828 = vmul.f32 %v1796, 0.1
          %v1829 = vmul.f32 %v1797, 0.1
          %v1830 = vmul.f32 %v1798, 0.1
          %v1831 = vmul.f32 %v1799, 0.1
          %v1832 = vmul.f32 %v1800, 0.1
          %v1833 = vmul.f32 %v1801, 0.1
          %v1834 = vsel %vm1802, %v1786, %v1818
          %v1835 = vsel %vm1803, %v1787, %v1819
          %v1836 = vsel %vm1804, %v1788, %v1820
          %v1837 = vsel %vm1805, %v1789, %v1821
          %v1838 = vsel %vm1806, %v1790, %v1822
          %v1839 = vsel %vm1807, %v1791, %v1823
          %v1840 = vsel %vm1808, %v1792, %v1824
          %v1841 = vsel %vm1809, %v1793, %v1825
          %v1842 = vsel %vm1810, %v1794, %v1826
          %v1843 = vsel %vm1811, %v1795, %v1827
          %v1844 = vsel %vm1812, %v1796, %v1828
          %v1845 = vsel %vm1813, %v1797, %v1829
          %v1846 = vsel %vm1814, %v1798, %v1830
          %v1847 = vsel %vm1815, %v1799, %v1831
          %v1848 = vsel %vm1816, %v1800, %v1832
          %v1849 = vsel %vm1817, %v1801, %v1833
          %v1850 = vpack.c.bf16 %v1835, %v1834
          %v1851 = vpack.c.bf16 %v1837, %v1836
          %v1852 = vpack.c.bf16 %v1839, %v1838
          %v1853 = vpack.c.bf16 %v1841, %v1840
          %v1854 = vpack.c.bf16 %v1843, %v1842
          %v1855 = vpack.c.bf16 %v1845, %v1844
          %v1856 = vpack.c.bf16 %v1847, %v1846
          %v1857 = vpack.c.bf16 %v1849, %v1848
          %v1858 = vld [vmem:[#allocation10] sm:$0xf]
          %v1859 = vld [vmem:[#allocation10 + $0x4] sm:$0xf]
          %v1860 = vld [vmem:[#allocation10 + $0x8] sm:$0xf]
          %v1861 = vld [vmem:[#allocation10 + $0xc] sm:$0xf]
          %v1862 = vld [vmem:[#allocation10 + $0x10] sm:$0xf]
          %v1863 = vld [vmem:[#allocation10 + $0x14] sm:$0xf]
          %v1864 = vld [vmem:[#allocation10 + $0x18] sm:$0xf]
          %v1865 = vld [vmem:[#allocation10 + $0x1c] sm:$0xf]
          %v1866 = vld [vmem:[#allocation10 + $0x20] sm:$0xf]
          %v1867 = vld [vmem:[#allocation10 + $0x24] sm:$0xf]
          %v1868 = vld [vmem:[#allocation10 + $0x28] sm:$0xf]
          %v1869 = vld [vmem:[#allocation10 + $0x2c] sm:$0xf]
          %v1870 = vld [vmem:[#allocation10 + $0x30] sm:$0xf]
          %v1871 = vld [vmem:[#allocation10 + $0x34] sm:$0xf]
          %v1872 = vld [vmem:[#allocation10 + $0x38] sm:$0xf]
          %v1873 = vld [vmem:[#allocation10 + $0x3c] sm:$0xf]
          %v1874 = vld [vmem:[%s5] sm:$0x1]
          %v1876 = vlaneseq
          %v1877 = vshrl.u32 %v1876, 7
          %v1878 = vsub.s32 0, %v1877
          %v1879 = vrot.slane %v1874, %v1878
          %v1897 = vunpack.c.l.b16 %v1858
          %v1898 = vunpack.c.l.b16 %v1859
          %v1899 = vunpack.c.l.b16 %v1860
          %v1900 = vunpack.c.l.b16 %v1861
          %v1901 = vunpack.c.l.b16 %v1862
          %v1902 = vunpack.c.l.b16 %v1863
          %v1903 = vunpack.c.l.b16 %v1864
          %v1904 = vunpack.c.l.b16 %v1865
          %v1905 = vunpack.c.l.b16 %v1866
          %v1906 = vunpack.c.l.b16 %v1867
          %v1907 = vunpack.c.l.b16 %v1868
          %v1908 = vunpack.c.l.b16 %v1869
          %v1909 = vunpack.c.l.b16 %v1870
          %v1910 = vunpack.c.l.b16 %v1871
          %v1911 = vunpack.c.l.b16 %v1872
          %v1912 = vunpack.c.l.b16 %v1873
          %v1913 = vpack.c.b16 %v1898, %v1897
          %v1914 = vpack.c.b16 %v1900, %v1899
          %v1915 = vpack.c.b16 %v1902, %v1901
          %v1916 = vpack.c.b16 %v1904, %v1903
          %v1917 = vpack.c.b16 %v1906, %v1905
          %v1918 = vpack.c.b16 %v1908, %v1907
          %v1919 = vpack.c.b16 %v1910, %v1909
          %v1920 = vpack.c.b16 %v1912, %v1911
          %1929 = vmatprep.subr.bf16.mxu0 0
          %1930 = vmatpush1.bf16.msra.mxu0 %v1913
          %1931 = vmatprep.subr.bf16.mxu0 0
          %1932 = vmatpush1.bf16.msra.mxu0 %v1914
          %1933 = vmatprep.subr.bf16.mxu0 0
          %1934 = vmatpush1.bf16.msra.mxu0 %v1915
          %1935 = vmatprep.subr.bf16.mxu0 0
          %1936 = vmatpush1.bf16.msra.mxu0 %v1916
          %1937 = vmatprep.subr.bf16.mxu0 0
          %1938 = vmatpush1.bf16.msra.mxu0 %v1917
          %1939 = vmatprep.subr.bf16.mxu0 0
          %1940 = vmatpush1.bf16.msra.mxu0 %v1918
          %1941 = vmatprep.subr.bf16.mxu0 0
          %1942 = vmatpush1.bf16.msra.mxu0 %v1919
          %1943 = vmatprep.subr.bf16.mxu0 0
          %1944 = vmatpush1.bf16.msra.mxu0 %v1920
          %1945 = vmatprep.subr.bf16.mxu0 0
          %1946 = vmatpush1.bf16.msra.mxu0 0
          %1947 = vmatprep.subr.bf16.mxu0 0
          %1948 = vmatpush1.bf16.msra.mxu0 0
          %1949 = vmatprep.subr.bf16.mxu0 0
          %1950 = vmatpush1.bf16.msra.mxu0 0
          %1951 = vmatprep.subr.bf16.mxu0 0
          %1952 = vmatpush1.bf16.msra.mxu0 0
          %1953 = vmatprep.subr.bf16.mxu0 0
          %1954 = vmatpush1.bf16.msra.mxu0 0
          %1955 = vmatprep.subr.bf16.mxu0 0
          %1956 = vmatpush1.bf16.msra.mxu0 0
          %1957 = vmatprep.subr.bf16.mxu0 0
          %1958 = vmatpush1.bf16.msra.mxu0 0
          %1959 = vmatprep.subr.bf16.mxu0 0
          %1960 = vmatpush1.bf16.msra.mxu0 0
          %1961 = vmatprep.mubr.bf16.mxu0 0
          %1962 = vmatmul.mubr.bf16.gmra.mrb[0].mxu0 %v1850
          %v1963 = vpop.f32.mrb[0].mxu0
          %v1964 = vadd.f32 %v1879, %v1963
          %v1965 = vpop.f32.mrb[0].mxu0
          %v1966 = vpop.f32.mrb[0].mxu0
          %v1967 = vadd.f32 %v1879, %v1966
          %v1968 = vpop.f32.mrb[0].mxu0
          %1969 = vmatprep.mubr.bf16.mxu0 0
          %1970 = vmatmul.mubr.bf16.gmra.mrb[0].mxu0 %v1851
          %v1971 = vpop.f32.mrb[0].mxu0
          %v1972 = vadd.f32 %v1879, %v1971
          %v1973 = vpop.f32.mrb[0].mxu0
          %v1974 = vpop.f32.mrb[0].mxu0
          %v1975 = vadd.f32 %v1879, %v1974
          %v1976 = vpop.f32.mrb[0].mxu0
          %1977 = vmatprep.mubr.bf16.mxu0 0
          %1978 = vmatmul.mubr.bf16.gmra.mrb[0].mxu0 %v1852
          %v1979 = vpop.f32.mrb[0].mxu0
          %v1980 = vadd.f32 %v1879, %v1979
          %v1981 = vpop.f32.mrb[0].mxu0
          %v1982 = vpop.f32.mrb[0].mxu0
          %v1983 = vadd.f32 %v1879, %v1982
          %v1984 = vpop.f32.mrb[0].mxu0
          %1985 = vmatprep.mubr.bf16.mxu0 0
          %1986 = vmatmul.mubr.bf16.gmra.mrb[0].mxu0 %v1853
          %v1987 = vpop.f32.mrb[0].mxu0
          %v1988 = vadd.f32 %v1879, %v1987
          %v1989 = vpop.f32.mrb[0].mxu0
          %v1990 = vpop.f32.mrb[0].mxu0
          %v1991 = vadd.f32 %v1879, %v1990
          %v1992 = vpop.f32.mrb[0].mxu0
          %1993 = vmatprep.mubr.bf16.mxu0 0
          %1994 = vmatmul.mubr.bf16.gmra.mrb[0].mxu0 %v1854
          %v1995 = vpop.f32.mrb[0].mxu0
          %v1996 = vadd.f32 %v1879, %v1995
          %v1997 = vpop.f32.mrb[0].mxu0
          %v1998 = vpop.f32.mrb[0].mxu0
          %v1999 = vadd.f32 %v1879, %v1998
          %v2000 = vpop.f32.mrb[0].mxu0
          %2001 = vmatprep.mubr.bf16.mxu0 0
          %2002 = vmatmul.mubr.bf16.gmra.mrb[0].mxu0 %v1855
          %v2003 = vpop.f32.mrb[0].mxu0
          %v2004 = vadd.f32 %v1879, %v2003
          %v2005 = vpop.f32.mrb[0].mxu0
          %v2006 = vpop.f32.mrb[0].mxu0
          %v2007 = vadd.f32 %v1879, %v2006
          %v2008 = vpop.f32.mrb[0].mxu0
          %2009 = vmatprep.mubr.bf16.mxu0 0
          %2010 = vmatmul.mubr.bf16.gmra.mrb[0].mxu0 %v1856
          %v2011 = vpop.f32.mrb[0].mxu0
          %v2012 = vadd.f32 %v1879, %v2011
          %v2013 = vpop.f32.mrb[0].mxu0
          %v2014 = vpop.f32.mrb[0].mxu0
          %v2015 = vadd.f32 %v1879, %v2014
          %v2016 = vpop.f32.mrb[0].mxu0
          %2017 = vmatprep.mubr.bf16.mxu0 0
          %2018 = vmatmul.mubr.bf16.gmra.mrb[0].mxu0 %v1857
          %v2019 = vpop.f32.mrb[0].mxu0
          %v2020 = vadd.f32 %v1879, %v2019
          %v2021 = vpop.f32.mrb[0].mxu0
          %v2022 = vpop.f32.mrb[0].mxu0
          %v2023 = vadd.f32 %v1879, %v2022
          %v2024 = vpop.f32.mrb[0].mxu0
          %2025 = vdwg.mxu0
          %2026 = vst [vmem:[%s322] sm:$0xff] %v1964
          %2027 = vst [vmem:[%s322 + $0x8] sm:$0xff] %v1967
          %2028 = vst [vmem:[%s322 + $0x10] sm:$0xff] %v1972
          %2029 = vst [vmem:[%s322 + $0x18] sm:$0xff] %v1975
          %2030 = vst [vmem:[%s322 + $0x20] sm:$0xff] %v1980
          %2031 = vst [vmem:[%s322 + $0x28] sm:$0xff] %v1983
          %2032 = vst [vmem:[%s322 + $0x30] sm:$0xff] %v1988
          %2033 = vst [vmem:[%s322 + $0x38] sm:$0xff] %v1991
          %2034 = vst [vmem:[%s322 + $0x40] sm:$0xff] %v1996
          %2035 = vst [vmem:[%s322 + $0x48] sm:$0xff] %v1999
          %2036 = vst [vmem:[%s322 + $0x50] sm:$0xff] %v2004
          %2037 = vst [vmem:[%s322 + $0x58] sm:$0xff] %v2007
          %2038 = vst [vmem:[%s322 + $0x60] sm:$0xff] %v2012
          %2039 = vst [vmem:[%s322 + $0x68] sm:$0xff] %v2015
          %2040 = vst [vmem:[%s322 + $0x70] sm:$0xff] %v2020
          %2041 = vst [vmem:[%s322 + $0x78] sm:$0xff] %v2023
        $region68: #{tpu_custom_call.1} parent=43 // pred_fallthru
          _
        %s2042 = sand.u32 %s183, 1
        %s2043 = scalar_lea.sflag [#allocation7], %s2042
        %s2044 = sand.u32 %s183, 1
        %s2045 = smul.addr %s2044, 128
        %s2046 = scalar_lea.vmem [#allocation11], %s2045
        // Predicated region
        $region73: #{tpu_custom_call.1} parent=43 // pred_check
          %p2047 = pneg %p193
        $region74: #{tpu_custom_call.1} parent=43 // pred_check_branch
          %2049 = sbr.rel (%p2047) target = $region76
        $region75: #{tpu_custom_call.1} parent=43 // pred_region
          %s2050 = smul.u32 %s28, %s29
          %s2051 = smul.u32 16, %s2050
          %s2053 = ssub.s32 2048, 2048
          %2054 = vsyncadd %s2043, %s2053
          %s2055 = smul.addr %s2051, 128
          %s2056 = scalar_lea.hbm %s6, %s2055
          %s2057 = sshll.u32 %s2046, 4
          %s2058 = int_to_ptr.vmem [resolvable:$true] %s2057
          %2063 = dma.vmem_to_hbm [thread:$0]  %s2058, 2048, %s2056, %s2043, 128, 128, 8
        $region76: #{tpu_custom_call.1} parent=43 // pred_fallthru
          _
      $region44: #{tpu_custom_call.1} parent=5 // pred_fallthru
        _
      %p2064 = scmp.le.s32.totalorder 2, %s19
      // Predicated region
      $region77: #{tpu_custom_call.1} parent=5 // pred_check
        %p2065 = pneg %p2064
      $region78: #{tpu_custom_call.1} parent=5 // pred_check_branch
        %2067 = sbr.rel (%p2065) target = $region80
      $region79: #{tpu_custom_call.1} parent=5 // pred_region
        %s2068 = ssub.s32 %s19, 2
        // Predicated region
        $region81: #{tpu_custom_call.1} parent=79 // pred_check
          %p2069 = pneg %p199
        $region82: #{tpu_custom_call.1} parent=79 // pred_check_branch
          %2071 = sbr.rel (%p2069) target = $region84
        $region83: #{tpu_custom_call.1} parent=79 // pred_region
          %s2072 = sand.u32 %s184, 1
          %s2073 = scalar_lea.sflag [#allocation7], %s2072
          %s2074 = sand.u32 %s184, 1
          %s2075 = smul.addr %s2074, 128
          %s2076 = scalar_lea.vmem [#allocation11], %s2075
          %2077 = dma.done %s2073, 2048
        $region84: #{tpu_custom_call.1} parent=79 // pred_fallthru
          _
      $region80: #{tpu_custom_call.1} parent=5 // pred_fallthru
        _
    $region6: #{tpu_custom_call.1} parent=1 // loop_footer
      %s23 = sadd.s32 1, %s19
    $region7: #{tpu_custom_call.1} parent=1 // loop_footer_branch
      %18 = sbr.rel target = $region3
    $region8: #{tpu_custom_call.1} parent=1 // loop_exit
      _
    %2078 = vsyncpa [#allocation6], 1
    %s2079 = scalar_lea.sflag [#allocation6], 1
    %2080 = vsyncpa %s2079, 1
    %2081 = vsyncpa [#allocation9], 1
    %2082 = vsyncpa [#allocation7], 1
    %s2083 = scalar_lea.sflag [#allocation7], 1
    %2084 = vsyncpa %s2083, 1

</llo_original>
